<compile_context>
chip_gen: v5e
topology: v5e:2x2
jax: 0.10.0
libtpu: 0.0.40
codegen_flags: <defaults>
</compile_context>

<pallas_src>
import functools
import math

import jax
import jax.numpy as jnp
from jax import lax
from jax.experimental import pallas as pl
from jax.experimental.pallas import tpu as pltpu

EPS = 1.1920929e-07  # torch.finfo(float32).eps — F.rms_norm default eps
NEG_BIG = -1e30      # finite mask value (avoids -inf -> NaN corner cases)


# --------------------------------------------------------------------------
# Kernel 1: repeat-fold + rms_norm + qkv + q/k norm + rotary + v-scale + resid
# --------------------------------------------------------------------------

def _prep_kernel(lam_ref, x_ref, wqkv_ref, cosf_ref, sinf_ref,
                 resid_ref, q_ref, k_ref, v_ref,
                 *, bpt, num_heads, head_dim, eps):
    lam0 = lam_ref[0]                                  # lambdas[0] from SMEM
    x = x_ref[0].astype(jnp.float32)                   # [Tt, D] (token rows if bpt>1)
    tt = x.shape[0]
    hd = num_heads * head_dim
    half = head_dim // 2

    # y = rms_norm(x); resid = x + y  (rows identical under the repeat, so this
    # is valid at token granularity for the folded layer).
    y = x * lax.rsqrt(jnp.mean(x * x, axis=-1, keepdims=True) + eps)
    resid = x + y

    # qkv projection (weight block is resident: constant index_map).
    qkv = jnp.dot(y, wqkv_ref[...].astype(jnp.float32),
                  preferred_element_type=jnp.float32)  # [Tt, 3*H*Dh]

    qs, ks, vs = [], [], []
    for h in range(num_heads):
        qh = qkv[:, h * head_dim:(h + 1) * head_dim]
        kh = qkv[:, hd + h * head_dim:hd + (h + 1) * head_dim]
        vh = qkv[:, 2 * hd + h * head_dim:2 * hd + (h + 1) * head_dim]
        qs.append(qh * lax.rsqrt(jnp.mean(qh * qh, axis=-1, keepdims=True) + eps))
        ks.append(kh * lax.rsqrt(jnp.mean(kh * kh, axis=-1, keepdims=True) + eps))
        vs.append(vh * lam0)                            # ve is None -> v = lambdas[0]*v
    q_all = jnp.concatenate(qs, axis=-1)                # [Tt, H*Dh]
    k_all = jnp.concatenate(ks, axis=-1)
    v_all = jnp.concatenate(vs, axis=-1)

    if bpt > 1:
        # Fold einops.repeat here: replicate each token row bpt times on the MXU
        # with an exact one-hot matrix (guaranteed lowering, exact in f32).
        tr = tt * bpt
        row = lax.broadcasted_iota(jnp.int32, (tr, tt), 0)
        col = lax.broadcasted_iota(jnp.int32, (tr, tt), 1)
        rep = ((row >= col * bpt) & (row < (col + 1) * bpt)).astype(jnp.float32)
        expand = lambda a: jnp.dot(rep, a, preferred_element_type=jnp.float32)
        q_all, k_all, v_all, resid = map(expand, (q_all, k_all, v_all, resid))

    resid_ref[0] = resid.astype(resid_ref.dtype)

    # Rotary (byte-position dependent) with rotate-half via pltpu.roll.
    cosf = cosf_ref[...].astype(jnp.float32)            # [Tr, Dh]  ([cos, cos])
    sinf = sinf_ref[...].astype(jnp.float32)            # [Tr, Dh]  ([sin, -sin])
    for h in range(num_heads):
        qh = q_all[:, h * head_dim:(h + 1) * head_dim]
        kh = k_all[:, h * head_dim:(h + 1) * head_dim]
        qh = qh * cosf + pltpu.roll(qh, shift=half, axis=1) * sinf
        kh = kh * cosf + pltpu.roll(kh, shift=half, axis=1) * sinf
        q_ref[0, h] = qh.astype(q_ref.dtype)
        k_ref[0, h] = kh.astype(k_ref.dtype)
        v_ref[0, h] = v_all[:, h * head_dim:(h + 1) * head_dim].astype(v_ref.dtype)


def _pick_tile(total, unit, target):
    """Largest divisor of `total` that is a multiple of `unit` and <= target, else full."""
    if total <= target:
        return total
    best = None
    for t in range(unit, target + 1, unit):
        if total % t == 0:
            best = t
    return best if best is not None else total


def _prep_call(x, p, cfg, *, fold_bpt):
    B, t_in, D = x.shape
    bpt = fold_bpt
    H, Dh = cfg["num_heads"], cfg["head_dim"]
    hd = H * Dh
    t_bytes = t_in * bpt

    # Tile sizes: keep second-to-last block dims multiples of 8 (or full extent).
    # Targets are sized for the smaller 32 MiB scoped / 64 MiB physical v7x VMEM.
    tt = _pick_tile(t_in, 8, max(8, 512 // bpt))
    tr = tt * bpt
    n_tiles = t_in // tt

    kernel = functools.partial(_prep_kernel, bpt=bpt, num_heads=H,
                               head_dim=Dh, eps=EPS)
    return pl.pallas_call(
        kernel,
        grid=(B, n_tiles),
        in_specs=[
            pl.BlockSpec(memory_space=pltpu.MemorySpace.SMEM),        # lambdas (2,)
            pl.BlockSpec((1, tt, D), lambda b, i: (b, i, 0)),          # x (token rows if folded)
            pl.BlockSpec((D, 3 * hd), lambda b, i: (0, 0)),            # qkv weight (resident)
            pl.BlockSpec((tr, Dh), lambda b, i: (i, 0)),               # cos_full
            pl.BlockSpec((tr, Dh), lambda b, i: (i, 0)),               # sin_full
        ],
        out_specs=[
            pl.BlockSpec((1, tr, D), lambda b, i: (b, i, 0)),          # resid = x_rep + y
            pl.BlockSpec((1, H, tr, Dh), lambda b, i: (b, 0, i, 0)),   # q  [B,H,T,Dh]
            pl.BlockSpec((1, H, tr, Dh), lambda b, i: (b, 0, i, 0)),   # k
            pl.BlockSpec((1, H, tr, Dh), lambda b, i: (b, 0, i, 0)),   # v
        ],
        out_shape=(
            jax.ShapeDtypeStruct((B, t_bytes, D), x.dtype),
            jax.ShapeDtypeStruct((B, H, t_bytes, Dh), x.dtype),
            jax.ShapeDtypeStruct((B, H, t_bytes, Dh), x.dtype),
            jax.ShapeDtypeStruct((B, H, t_bytes, Dh), x.dtype),
        ),
        compiler_params=pltpu.CompilerParams(
            dimension_semantics=("parallel", "parallel")),
    )(p["lambdas"], x, p["qkv_w_t"], p["cos_full"], p["sin_full"])


# --------------------------------------------------------------------------
# Kernel 2: banded flash attention + c_proj + residual add
# --------------------------------------------------------------------------

def _attn_kernel(q_ref, k_ref, v_ref, resid_ref, wproj_ref, o_ref,
                 m_sc, l_sc, acc_sc,
                 *, scale, window, tq, n_band, num_heads, head_dim):
    i = pl.program_id(1)
    j = pl.program_id(2)
    kv_tile = i - (n_band - 1) + j

    @pl.when(j == 0)
    def _init():
        m_sc[...] = jnp.full(m_sc.shape, -jnp.inf, dtype=jnp.float32)
        l_sc[...] = jnp.zeros(l_sc.shape, jnp.float32)
        acc_sc[...] = jnp.zeros(acc_sc.shape, jnp.float32)

    @pl.when(kv_tile >= 0)
    def _accumulate():
        qpos = i * tq + lax.broadcasted_iota(jnp.int32, (tq, tq), 0)
        kpos = kv_tile * tq + lax.broadcasted_iota(jnp.int32, (tq, tq), 1)
        mask = (qpos >= kpos) & ((qpos - kpos) < window)   # sliding_window_causal_mask
        for h in range(num_heads):
            q = q_ref[0, h].astype(jnp.float32)
            k = k_ref[0, h].astype(jnp.float32)
            v = v_ref[0, h].astype(jnp.float32)
            s = lax.dot_general(q, k, (((1,), (1,)), ((), ())),
                                preferred_element_type=jnp.float32) * scale
            s = jnp.where(mask, s, NEG_BIG)
            m_prev = m_sc[h]
            m_new = jnp.maximum(m_prev, jnp.max(s, axis=-1, keepdims=True))
            alpha = jnp.exp(m_prev - m_new)
            p = jnp.exp(s - m_new)
            l_sc[h] = alpha * l_sc[h] + jnp.sum(p, axis=-1, keepdims=True)
            acc_sc[h] = alpha * acc_sc[h] + jnp.dot(p, v,
                                                    preferred_element_type=jnp.float32)
            m_sc[h] = m_new

    @pl.when(j == n_band - 1)
    def _finalize():
        outs = []
        for h in range(num_heads):
            l = l_sc[h]
            inv = pl.reciprocal(l, approx=True)
            inv = inv * (2.0 - l * inv)          # one Newton step -> f32-accurate
            outs.append(acc_sc[h] * inv)
        o = jnp.concatenate(outs, axis=-1)       # [tq, H*Dh]
        attn = jnp.dot(o, wproj_ref[...].astype(jnp.float32),
                       preferred_element_type=jnp.float32)
        o_ref[0] = (resid_ref[0].astype(jnp.float32) + attn).astype(o_ref.dtype)


def _attn_call(q, k, v, resid, p, cfg):
    B, H, T, Dh = q.shape
    D = resid.shape[-1]
    hd = H * Dh
    W = cfg["window"]
    tq = _pick_tile(T, 8, cfg.get("attn_tile", 128))
    nq = T // tq
    n_band = min(1 + (max(W, 1) - 1 + tq - 1) // tq, nq)   # kv tiles that can hit the band
    n_band = max(n_band, 1)

    kv_map = lambda b, i, j: (b, 0, jnp.maximum(i - (n_band - 1) + j, 0), 0)
    kernel = functools.partial(_attn_kernel, scale=cfg["scale"], window=W, tq=tq,
                               n_band=n_band, num_heads=H, head_dim=Dh)
    return pl.pallas_call(
        kernel,
        grid=(B, nq, n_band),
        in_specs=[
            pl.BlockSpec((1, H, tq, Dh), lambda b, i, j: (b, 0, i, 0)),  # q
            pl.BlockSpec((1, H, tq, Dh), kv_map),                        # k (banded)
            pl.BlockSpec((1, H, tq, Dh), kv_map),                        # v (banded)
            pl.BlockSpec((1, tq, D), lambda b, i, j: (b, i, 0)),         # resid
            pl.BlockSpec((hd, D), lambda b, i, j: (0, 0)),               # c_proj weight (resident)
        ],
        out_specs=pl.BlockSpec((1, tq, D), lambda b, i, j: (b, i, 0)),
        out_shape=jax.ShapeDtypeStruct((B, T, D), q.dtype),
        scratch_shapes=[
            pltpu.VMEM((H, tq, 1), jnp.float32),    # running max
            pltpu.VMEM((H, tq, 1), jnp.float32),    # running denom
            pltpu.VMEM((H, tq, Dh), jnp.float32),   # running numerator
        ],
        compiler_params=pltpu.CompilerParams(
            dimension_semantics=("parallel", "parallel", "arbitrary")),
    )(q, k, v, resid, p["c_proj_w_t"])


# --------------------------------------------------------------------------
# Forward
# --------------------------------------------------------------------------

def byte_mixout_forward(x, p, cfg):
    """ByteMixout with byte_mixout_method='copy', use_byte_self_attn=True."""
    bpt = cfg["bpt"]
    for layer in range(cfg["n_layer_out"]):
        fold = bpt if layer == 0 else 1          # repeat is folded into layer-0 prep
        resid, q, k, v = _prep_call(x, p, cfg, fold_bpt=fold)
        x = _attn_call(q, k, v, resid, p, cfg)   # = x_rep + norm(x_rep) + attn(norm(x_rep))
    return x


# --------------------------------------------------------------------------
# Rotary tables + pure-JAX reference (matches the PyTorch module)
# --------------------------------------------------------------------------

def make_rotary_tables(head_dim, max_seq_len):
    n = head_dim // 4
    angular_freq = (1.0 / 1024) ** jnp.linspace(0.0, 1.0, n, dtype=jnp.float32)
    angular_freq = jnp.concatenate([angular_freq, jnp.zeros(n, jnp.float32)])  # [Dh/2]
    t = jnp.arange(max_seq_len, dtype=jnp.float32)
    theta = jnp.einsum("i,j->ij", t, angular_freq)                              # [T, Dh/2]
    return jnp.cos(theta), jnp.sin(theta)


def apply_rotary(x_BTHD, cos, sin):
    T = x_BTHD.shape[1]
    c = cos[None, :T, None, :]
    s = sin[None, :T, None, :]
    x = x_BTHD.astype(jnp.float32)
    x1, x2 = jnp.split(x, 2, axis=-1)
    y1 = x1 * c + x2 * s
    y2 = -x1 * s + x2 * c
    return jnp.concatenate([y1, y2], axis=-1).astype(x_BTHD.dtype)


def _ref_rmsnorm(x):
    x = x.astype(jnp.float32)
    return x * lax.rsqrt(jnp.mean(x * x, axis=-1, keepdims=True) + EPS)


def _ref_attention(q, k, v, scale, window):
    T = q.shape[1]
    s = jnp.einsum("btd,bsd->bts", q, k) * scale
    qi = jnp.arange(T)[:, None]
    ki = jnp.arange(T)[None, :]
    mask = (qi >= ki) & ((qi - ki) < window)
    s = jnp.where(mask[None], s, -jnp.inf)
    p = jax.nn.softmax(s, axis=-1)
    return jnp.einsum("bts,bsd->btd", p, v)


def reference_forward(x, p, cfg):
    bpt, H, Dh = cfg["bpt"], cfg["num_heads"], cfg["head_dim"]
    x = jnp.repeat(x, bpt, axis=1)
    for _ in range(cfg["n_layer_out"]):
        y = _ref_rmsnorm(x)
        B, T, D = y.shape
        qkv = (y.reshape(B * T, D) @ p["qkv_w_t"]).reshape(B, T, 3 * H, Dh)
        q, k, v = jnp.split(qkv, 3, axis=2)
        q, k = _ref_rmsnorm(q), _ref_rmsnorm(k)
        q = apply_rotary(q, p["cos"], p["sin"])
        k = apply_rotary(k, p["cos"], p["sin"])
        v = p["lambdas"][0] * v
        to_bh = lambda t: t.transpose(0, 2, 1, 3).reshape(B * H, T, Dh)
        o = _ref_attention(to_bh(q), to_bh(k), to_bh(v), cfg["scale"], cfg["window"])
        o = o.reshape(B, H, T, Dh).transpose(0, 2, 1, 3).reshape(B * T, H * Dh)
        attn = (o @ p["c_proj_w_t"]).reshape(B, T, D)
        x = x + (y + attn)
    return x


# ----------------------------------- main -----------------------------------

if __name__ == "__main__":
    # Small config consistent with ByteHyperparameters / ModelDims:
    #   bytes_per_token=4, sliding_window_tokens=2, n_layer_out=1,
    #   model_dim=128 -> num_heads=1, head_dim=128, max_seq_len=8 tokens.
    B, T_TOK, DIM = 2, 8, 128
    BPT, SWT, N_LAYER = 4, 2, 1
    HEAD_DIM = 128
    NUM_HEADS = max(1, DIM // 128)
    HDIM = NUM_HEADS * HEAD_DIM
    T_BYTES = T_TOK * BPT

    cfg = dict(bpt=BPT, window=SWT * BPT, n_layer_out=N_LAYER,
               num_heads=NUM_HEADS, head_dim=HEAD_DIM, scale=0.12,
               attn_tile=16)   # small q/kv tile so the banded/online-softmax path is exercised

    key = jax.random.PRNGKey(0)
    kx, kqkv, kproj = jax.random.split(key, 3)

    qkv_bound = math.sqrt(3.0) * 0.5 * DIM ** -0.5
    qkv_w = jax.random.uniform(kqkv, (3, HDIM, DIM), jnp.float32,
                               minval=-qkv_bound, maxval=qkv_bound)
    cproj_bound = math.sqrt(3.0) * 0.5 * HDIM ** -0.5
    # NOTE: the PyTorch module zero-inits c_proj.weight; use a deterministic
    # nonzero init here so the fused attention+c_proj path is actually exercised.
    c_proj_w = jax.random.uniform(kproj, (DIM, HDIM), jnp.float32,
                                  minval=-cproj_bound, maxval=cproj_bound)

    cos, sin = make_rotary_tables(HEAD_DIM, T_BYTES)
    params = dict(
        qkv_w_t=qkv_w.reshape(3 * HDIM, DIM).T,          # F.linear uses x @ W.T
        c_proj_w_t=c_proj_w.T,
        lambdas=jnp.array([0.5, 0.5], jnp.float32),
        cos=cos, sin=sin,                                # half-width tables (reference)
        cos_full=jnp.concatenate([cos, cos], axis=-1),   # full-width tables (pltpu.roll rotary)
        sin_full=jnp.concatenate([sin, -sin], axis=-1),
    )

    x = jax.random.normal(kx, (B, T_TOK, DIM), jnp.float32)

    out = jax.jit(functools.partial(byte_mixout_forward, cfg=cfg))(x, params)
    out = jax.block_until_ready(out)

    ref = reference_forward(x, params, cfg)
    assert out.shape == (B, T_BYTES, DIM)
    err = float(jnp.max(jnp.abs(out - ref)))
    assert jnp.allclose(out, ref, atol=1e-3, rtol=1e-3), f"max err {err}"

    print("KERNEL_OK")
</pallas_src>

<mosaic_0001>
module attributes {stable_mosaic.version = 11 : i64} {
  func.func @_prep_kernel(%arg0: i32, %arg1: i32, %arg2: memref<2xf32, #tpu.memory_space<smem>>, %arg3: memref<1x8x128xf32, #tpu.memory_space<vmem>>, %arg4: memref<128x384xf32, #tpu.memory_space<vmem>>, %arg5: memref<32x128xf32, #tpu.memory_space<vmem>>, %arg6: memref<32x128xf32, #tpu.memory_space<vmem>>, %arg7: memref<1x32x128xf32, #tpu.memory_space<vmem>>, %arg8: memref<1x1x32x128xf32, #tpu.memory_space<vmem>>, %arg9: memref<1x1x32x128xf32, #tpu.memory_space<vmem>>, %arg10: memref<1x1x32x128xf32, #tpu.memory_space<vmem>>) attributes {dimension_semantics = [#tpu.dimension_semantics<parallel>, #tpu.dimension_semantics<parallel>], iteration_bounds = array<i64: 2, 1>, scalar_prefetch = 0 : i64, scratch_operands = 0 : i64, tpu.core_type = #tpu.core_type<tc>, window_params = [{transform_indices = @transform_0, window_bounds = array<i64: 2>}, {transform_indices = @transform_1, window_bounds = array<i64: 1, 8, 128>}, {pipeline_mode = #tpu.pipeline_mode<synchronous>, transform_indices = @transform_2, window_bounds = array<i64: 128, 384>}, {transform_indices = @transform_3, window_bounds = array<i64: 32, 128>}, {transform_indices = @transform_4, window_bounds = array<i64: 32, 128>}, {transform_indices = @transform_5, window_bounds = array<i64: 1, 32, 128>}, {transform_indices = @transform_6, window_bounds = array<i64: 1, 1, 32, 128>}, {transform_indices = @transform_7, window_bounds = array<i64: 1, 1, 32, 128>}, {transform_indices = @transform_8, window_bounds = array<i64: 1, 1, 32, 128>}]} {
    %c0 = arith.constant 0 : index
    %0 = memref.load %arg2[%c0] : memref<2xf32, #tpu.memory_space<smem>>
    %c0_0 = arith.constant 0 : index
    %c0_1 = arith.constant 0 : index
    %c0_2 = arith.constant 0 : index
    %1 = vector.load %arg3[%c0_0, %c0_1, %c0_2] : memref<1x8x128xf32, #tpu.memory_space<vmem>>, vector<1x8x128xf32>
    %2 = vector.shape_cast %1 : vector<1x8x128xf32> to vector<8x128xf32>
    %3 = arith.mulf %2, %2 : vector<8x128xf32>
    %cst = arith.constant dense<0.000000e+00> : vector<8xf32>
    %4 = vector.multi_reduction <add>, %3, %cst [1] : vector<8x128xf32> to vector<8xf32>
    %5 = vector.shape_cast %4 : vector<8xf32> to vector<8x1xf32>
    %cst_3 = arith.constant 1.280000e+02 : f32
    %6 = vector.broadcast %cst_3 : f32 to vector<8x1xf32>
    %7 = arith.divf %5, %6 : vector<8x1xf32>
    %cst_4 = arith.constant 1.1920929E-7 : f32
    %8 = vector.broadcast %cst_4 : f32 to vector<8x1xf32>
    %9 = arith.addf %7, %8 : vector<8x1xf32>
    %10 = math.rsqrt %9 : vector<8x1xf32>
    %11 = vector.broadcast %10 : vector<8x1xf32> to vector<8x128xf32>
    %12 = arith.mulf %2, %11 : vector<8x128xf32>
    %13 = arith.addf %2, %12 : vector<8x128xf32>
    %c0_5 = arith.constant 0 : index
    %c0_6 = arith.constant 0 : index
    %14 = vector.load %arg4[%c0_5, %c0_6] : memref<128x384xf32, #tpu.memory_space<vmem>>, vector<128x384xf32>
    %cst_7 = arith.constant dense<0.000000e+00> : vector<8x384xf32>
    %15 = tpu.matmul %12, %14, %cst_7 {dimension_numbers = #tpu.dot_dimension_numbers<[1], [0], [0], [1], [0, 0, 1, 1], [], []>} : vector<8x128xf32>, vector<128x384xf32>, vector<8x384xf32> -> vector<8x384xf32>
    %16 = vector.extract_strided_slice %15 {offsets = [0, 0], sizes = [8, 128], strides = [1, 1]} : vector<8x384xf32> to vector<8x128xf32>
    %17 = vector.extract_strided_slice %15 {offsets = [0, 128], sizes = [8, 128], strides = [1, 1]} : vector<8x384xf32> to vector<8x128xf32>
    %18 = vector.extract_strided_slice %15 {offsets = [0, 256], sizes = [8, 128], strides = [1, 1]} : vector<8x384xf32> to vector<8x128xf32>
    %19 = arith.mulf %16, %16 : vector<8x128xf32>
    %cst_8 = arith.constant dense<0.000000e+00> : vector<8xf32>
    %20 = vector.multi_reduction <add>, %19, %cst_8 [1] : vector<8x128xf32> to vector<8xf32>
    %21 = vector.shape_cast %20 : vector<8xf32> to vector<8x1xf32>
    %cst_9 = arith.constant 1.280000e+02 : f32
    %22 = vector.broadcast %cst_9 : f32 to vector<8x1xf32>
    %23 = arith.divf %21, %22 : vector<8x1xf32>
    %cst_10 = arith.constant 1.1920929E-7 : f32
    %24 = vector.broadcast %cst_10 : f32 to vector<8x1xf32>
    %25 = arith.addf %23, %24 : vector<8x1xf32>
    %26 = math.rsqrt %25 : vector<8x1xf32>
    %27 = vector.broadcast %26 : vector<8x1xf32> to vector<8x128xf32>
    %28 = arith.mulf %16, %27 : vector<8x128xf32>
    %29 = arith.mulf %17, %17 : vector<8x128xf32>
    %cst_11 = arith.constant dense<0.000000e+00> : vector<8xf32>
    %30 = vector.multi_reduction <add>, %29, %cst_11 [1] : vector<8x128xf32> to vector<8xf32>
    %31 = vector.shape_cast %30 : vector<8xf32> to vector<8x1xf32>
    %cst_12 = arith.constant 1.280000e+02 : f32
    %32 = vector.broadcast %cst_12 : f32 to vector<8x1xf32>
    %33 = arith.divf %31, %32 : vector<8x1xf32>
    %cst_13 = arith.constant 1.1920929E-7 : f32
    %34 = vector.broadcast %cst_13 : f32 to vector<8x1xf32>
    %35 = arith.addf %33, %34 : vector<8x1xf32>
    %36 = math.rsqrt %35 : vector<8x1xf32>
    %37 = vector.broadcast %36 : vector<8x1xf32> to vector<8x128xf32>
    %38 = arith.mulf %17, %37 : vector<8x128xf32>
    %39 = vector.broadcast %0 : f32 to vector<8x128xf32>
    %40 = arith.mulf %18, %39 : vector<8x128xf32>
    %41 = tpu.iota {dimensions = array<i32: 0>} : vector<32x8xi32>
    %42 = tpu.iota {dimensions = array<i32: 1>} : vector<32x8xi32>
    %c4_i32 = arith.constant 4 : i32
    %43 = vector.broadcast %c4_i32 : i32 to vector<32x8xi32>
    %44 = arith.muli %42, %43 : vector<32x8xi32>
    %45 = arith.cmpi sge, %41, %44 : vector<32x8xi32>
    %c1_i32 = arith.constant 1 : i32
    %46 = vector.broadcast %c1_i32 : i32 to vector<32x8xi32>
    %47 = arith.addi %42, %46 : vector<32x8xi32>
    %c4_i32_14 = arith.constant 4 : i32
    %48 = vector.broadcast %c4_i32_14 : i32 to vector<32x8xi32>
    %49 = arith.muli %47, %48 : vector<32x8xi32>
    %50 = arith.cmpi slt, %41, %49 : vector<32x8xi32>
    %51 = arith.andi %45, %50 : vector<32x8xi1>
    %52 = arith.extui %51 : vector<32x8xi1> to vector<32x8xi32>
    %53 = arith.sitofp %52 : vector<32x8xi32> to vector<32x8xf32>
    %cst_15 = arith.constant dense<0.000000e+00> : vector<32x128xf32>
    %54 = tpu.matmul %53, %28, %cst_15 {dimension_numbers = #tpu.dot_dimension_numbers<[1], [0], [0], [1], [0, 0, 1, 1], [], []>} : vector<32x8xf32>, vector<8x128xf32>, vector<32x128xf32> -> vector<32x128xf32>
    %cst_16 = arith.constant dense<0.000000e+00> : vector<32x128xf32>
    %55 = tpu.matmul %53, %38, %cst_16 {dimension_numbers = #tpu.dot_dimension_numbers<[1], [0], [0], [1], [0, 0, 1, 1], [], []>} : vector<32x8xf32>, vector<8x128xf32>, vector<32x128xf32> -> vector<32x128xf32>
    %cst_17 = arith.constant dense<0.000000e+00> : vector<32x128xf32>
    %56 = tpu.matmul %53, %40, %cst_17 {dimension_numbers = #tpu.dot_dimension_numbers<[1], [0], [0], [1], [0, 0, 1, 1], [], []>} : vector<32x8xf32>, vector<8x128xf32>, vector<32x128xf32> -> vector<32x128xf32>
    %cst_18 = arith.constant dense<0.000000e+00> : vector<32x128xf32>
    %57 = tpu.matmul %53, %13, %cst_18 {dimension_numbers = #tpu.dot_dimension_numbers<[1], [0], [0], [1], [0, 0, 1, 1], [], []>} : vector<32x8xf32>, vector<8x128xf32>, vector<32x128xf32> -> vector<32x128xf32>
    %c0_19 = arith.constant 0 : index
    %c0_20 = arith.constant 0 : index
    %c0_21 = arith.constant 0 : index
    %58 = vector.load %arg7[%c0_19, %c0_20, %c0_21] : memref<1x32x128xf32, #tpu.memory_space<vmem>>, vector<1x32x128xf32>
    %59 = vector.shape_cast %58 : vector<1x32x128xf32> to vector<32x128xf32>
    %60 = vector.shape_cast %57 : vector<32x128xf32> to vector<1x32x128xf32>
    tpu.vector_store %arg7[%c0_19, %c0_20, %c0_21], %60 {strides = array<i32>} : memref<1x32x128xf32, #tpu.memory_space<vmem>>, vector<1x32x128xf32>,
    %c0_22 = arith.constant 0 : index
    %c0_23 = arith.constant 0 : index
    %61 = vector.load %arg5[%c0_22, %c0_23] : memref<32x128xf32, #tpu.memory_space<vmem>>, vector<32x128xf32>
    %c0_24 = arith.constant 0 : index
    %c0_25 = arith.constant 0 : index
    %62 = vector.load %arg6[%c0_24, %c0_25] : memref<32x128xf32, #tpu.memory_space<vmem>>, vector<32x128xf32>
    %63 = arith.mulf %54, %61 : vector<32x128xf32>
    %c64_i32 = arith.constant 64 : i32
    %64 = tpu.dynamic_rotate %54 by %c64_i32 dim 1 : vector<32x128xf32>, i32 -> vector<32x128xf32>
    %65 = arith.mulf %64, %62 : vector<32x128xf32>
    %66 = arith.addf %63, %65 : vector<32x128xf32>
    %67 = arith.mulf %55, %61 : vector<32x128xf32>
    %c64_i32_26 = arith.constant 64 : i32
    %68 = tpu.dynamic_rotate %55 by %c64_i32_26 dim 1 : vector<32x128xf32>, i32 -> vector<32x128xf32>
    %69 = arith.mulf %68, %62 : vector<32x128xf32>
    %70 = arith.addf %67, %69 : vector<32x128xf32>
    %c0_27 = arith.constant 0 : index
    %c0_28 = arith.constant 0 : index
    %c0_29 = arith.constant 0 : index
    %c0_30 = arith.constant 0 : index
    %71 = vector.load %arg8[%c0_27, %c0_28, %c0_29, %c0_30] : memref<1x1x32x128xf32, #tpu.memory_space<vmem>>, vector<1x1x32x128xf32>
    %72 = vector.shape_cast %71 : vector<1x1x32x128xf32> to vector<32x128xf32>
    %73 = vector.shape_cast %66 : vector<32x128xf32> to vector<1x1x32x128xf32>
    tpu.vector_store %arg8[%c0_27, %c0_28, %c0_29, %c0_30], %73 {strides = array<i32>} : memref<1x1x32x128xf32, #tpu.memory_space<vmem>>, vector<1x1x32x128xf32>,
    %c0_31 = arith.constant 0 : index
    %c0_32 = arith.constant 0 : index
    %c0_33 = arith.constant 0 : index
    %c0_34 = arith.constant 0 : index
    %74 = vector.load %arg9[%c0_31, %c0_32, %c0_33, %c0_34] : memref<1x1x32x128xf32, #tpu.memory_space<vmem>>, vector<1x1x32x128xf32>
    %75 = vector.shape_cast %74 : vector<1x1x32x128xf32> to vector<32x128xf32>
    %76 = vector.shape_cast %70 : vector<32x128xf32> to vector<1x1x32x128xf32>
    tpu.vector_store %arg9[%c0_31, %c0_32, %c0_33, %c0_34], %76 {strides = array<i32>} : memref<1x1x32x128xf32, #tpu.memory_space<vmem>>, vector<1x1x32x128xf32>,
    %c0_35 = arith.constant 0 : index
    %c0_36 = arith.constant 0 : index
    %c0_37 = arith.constant 0 : index
    %c0_38 = arith.constant 0 : index
    %77 = vector.load %arg10[%c0_35, %c0_36, %c0_37, %c0_38] : memref<1x1x32x128xf32, #tpu.memory_space<vmem>>, vector<1x1x32x128xf32>
    %78 = vector.shape_cast %77 : vector<1x1x32x128xf32> to vector<32x128xf32>
    %79 = vector.shape_cast %56 : vector<32x128xf32> to vector<1x1x32x128xf32>
    tpu.vector_store %arg10[%c0_35, %c0_36, %c0_37, %c0_38], %79 {strides = array<i32>} : memref<1x1x32x128xf32, #tpu.memory_space<vmem>>, vector<1x1x32x128xf32>,
    return
  }
  func.func @transform_0(%arg0: i32, %arg1: i32) -> i32 {
    %c0_i32 = arith.constant 0 : i32
    %c0_i32_0 = arith.constant 0 : i32
    return %c0_i32 : i32
  }
  func.func @transform_1(%arg0: i32, %arg1: i32) -> (i32, i32, i32) {
    %c0_i32 = arith.constant 0 : i32
    %c0_i32_0 = arith.constant 0 : i32
    return %arg0, %arg1, %c0_i32 : i32, i32, i32
  }
  func.func @transform_2(%arg0: i32, %arg1: i32) -> (i32, i32) {
    %c0_i32 = arith.constant 0 : i32
    %c0_i32_0 = arith.constant 0 : i32
    %c0_i32_1 = arith.constant 0 : i32
    return %c0_i32, %c0_i32_0 : i32, i32
  }
  func.func @transform_3(%arg0: i32, %arg1: i32) -> (i32, i32) {
    %c0_i32 = arith.constant 0 : i32
    %c0_i32_0 = arith.constant 0 : i32
    return %arg1, %c0_i32 : i32, i32
  }
  func.func @transform_4(%arg0: i32, %arg1: i32) -> (i32, i32) {
    %c0_i32 = arith.constant 0 : i32
    %c0_i32_0 = arith.constant 0 : i32
    return %arg1, %c0_i32 : i32, i32
  }
  func.func @transform_5(%arg0: i32, %arg1: i32) -> (i32, i32, i32) {
    %c0_i32 = arith.constant 0 : i32
    %c0_i32_0 = arith.constant 0 : i32
    return %arg0, %arg1, %c0_i32 : i32, i32, i32
  }
  func.func @transform_6(%arg0: i32, %arg1: i32) -> (i32, i32, i32, i32) {
    %c0_i32 = arith.constant 0 : i32
    %c0_i32_0 = arith.constant 0 : i32
    %c0_i32_1 = arith.constant 0 : i32
    return %arg0, %c0_i32, %arg1, %c0_i32_0 : i32, i32, i32, i32
  }
  func.func @transform_7(%arg0: i32, %arg1: i32) -> (i32, i32, i32, i32) {
    %c0_i32 = arith.constant 0 : i32
    %c0_i32_0 = arith.constant 0 : i32
    %c0_i32_1 = arith.constant 0 : i32
    return %arg0, %c0_i32, %arg1, %c0_i32_0 : i32, i32, i32, i32
  }
  func.func @transform_8(%arg0: i32, %arg1: i32) -> (i32, i32, i32, i32) {
    %c0_i32 = arith.constant 0 : i32
    %c0_i32_0 = arith.constant 0 : i32
    %c0_i32_1 = arith.constant 0 : i32
    return %arg0, %c0_i32, %arg1, %c0_i32_0 : i32, i32, i32, i32
  }
}

module attributes {stable_mosaic.version = 11 : i64} {
  func.func @_attn_kernel(%arg0: i32, %arg1: i32, %arg2: i32, %arg3: memref<1x1x16x128xf32, #tpu.memory_space<vmem>>, %arg4: memref<1x1x16x128xf32, #tpu.memory_space<vmem>>, %arg5: memref<1x1x16x128xf32, #tpu.memory_space<vmem>>, %arg6: memref<1x16x128xf32, #tpu.memory_space<vmem>>, %arg7: memref<128x128xf32, #tpu.memory_space<vmem>>, %arg8: memref<1x16x128xf32, #tpu.memory_space<vmem>>, %arg9: memref<1x16x1xf32, #tpu.memory_space<vmem>>, %arg10: memref<1x16x1xf32, #tpu.memory_space<vmem>>, %arg11: memref<1x16x128xf32, #tpu.memory_space<vmem>>) attributes {dimension_semantics = [#tpu.dimension_semantics<parallel>, #tpu.dimension_semantics<parallel>, #tpu.dimension_semantics<arbitrary>], iteration_bounds = array<i64: 2, 2, 2>, scalar_prefetch = 0 : i64, scratch_operands = 3 : i64, tpu.core_type = #tpu.core_type<tc>, window_params = [{transform_indices = @transform_0, window_bounds = array<i64: 1, 1, 16, 128>}, {transform_indices = @transform_1, window_bounds = array<i64: 1, 1, 16, 128>}, {transform_indices = @transform_2, window_bounds = array<i64: 1, 1, 16, 128>}, {transform_indices = @transform_3, window_bounds = array<i64: 1, 16, 128>}, {pipeline_mode = #tpu.pipeline_mode<synchronous>, transform_indices = @transform_4, window_bounds = array<i64: 128, 128>}, {transform_indices = @transform_5, window_bounds = array<i64: 1, 16, 128>}]} {
    %c1_i32 = arith.constant 1 : i32
    %0 = arith.subi %arg1, %c1_i32 : i32
    %1 = arith.addi %0, %arg2 : i32
    %c0_i32 = arith.constant 0 : i32
    %2 = arith.cmpi eq, %arg2, %c0_i32 : i32
    %3 = arith.extui %2 : i1 to i32
    %c0_i32_0 = arith.constant 0 : i32
    %4 = arith.cmpi ne, %3, %c0_i32_0 : i32
    scf.if %4 {
      %cst = arith.constant 0xFF800000 : f32
      %11 = vector.broadcast %cst : f32 to vector<1x16x1xf32>
      %c0 = arith.constant 0 : index
      %c0_5 = arith.constant 0 : index
      %c0_6 = arith.constant 0 : index
      %12 = vector.load %arg9[%c0, %c0_5, %c0_6] : memref<1x16x1xf32, #tpu.memory_space<vmem>>, vector<1x16x1xf32>
      tpu.vector_store %arg9[%c0, %c0_5, %c0_6], %11 {strides = array<i32>} : memref<1x16x1xf32, #tpu.memory_space<vmem>>, vector<1x16x1xf32>,
      %cst_7 = arith.constant 0.000000e+00 : f32
      %13 = vector.broadcast %cst_7 : f32 to vector<1x16x1xf32>
      %c0_8 = arith.constant 0 : index
      %c0_9 = arith.constant 0 : index
      %c0_10 = arith.constant 0 : index
      %14 = vector.load %arg10[%c0_8, %c0_9, %c0_10] : memref<1x16x1xf32, #tpu.memory_space<vmem>>, vector<1x16x1xf32>
      tpu.vector_store %arg10[%c0_8, %c0_9, %c0_10], %13 {strides = array<i32>} : memref<1x16x1xf32, #tpu.memory_space<vmem>>, vector<1x16x1xf32>,
      %cst_11 = arith.constant 0.000000e+00 : f32
      %15 = vector.broadcast %cst_11 : f32 to vector<1x16x128xf32>
      %c0_12 = arith.constant 0 : index
      %c0_13 = arith.constant 0 : index
      %c0_14 = arith.constant 0 : index
      %16 = vector.load %arg11[%c0_12, %c0_13, %c0_14] : memref<1x16x128xf32, #tpu.memory_space<vmem>>, vector<1x16x128xf32>
      tpu.vector_store %arg11[%c0_12, %c0_13, %c0_14], %15 {strides = array<i32>} : memref<1x16x128xf32, #tpu.memory_space<vmem>>, vector<1x16x128xf32>,
    } else {
    }
    %c0_i32_1 = arith.constant 0 : i32
    %5 = arith.cmpi sge, %1, %c0_i32_1 : i32
    %6 = arith.extui %5 : i1 to i32
    %c0_i32_2 = arith.constant 0 : i32
    %7 = arith.cmpi ne, %6, %c0_i32_2 : i32
    scf.if %7 {
      %c16_i32 = arith.constant 16 : i32
      %11 = arith.muli %arg1, %c16_i32 : i32
      %12 = tpu.iota {dimensions = array<i32: 0>} : vector<16x16xi32>
      %13 = vector.broadcast %11 : i32 to vector<16x16xi32>
      %14 = arith.addi %13, %12 : vector<16x16xi32>
      %c16_i32_5 = arith.constant 16 : i32
      %15 = arith.muli %1, %c16_i32_5 : i32
      %16 = tpu.iota {dimensions = array<i32: 1>} : vector<16x16xi32>
      %17 = vector.broadcast %15 : i32 to vector<16x16xi32>
      %18 = arith.addi %17, %16 : vector<16x16xi32>
      %19 = arith.cmpi sge, %14, %18 : vector<16x16xi32>
      %20 = arith.subi %14, %18 : vector<16x16xi32>
      %c8_i32 = arith.constant 8 : i32
      %21 = vector.broadcast %c8_i32 : i32 to vector<16x16xi32>
      %22 = arith.cmpi slt, %20, %21 : vector<16x16xi32>
      %23 = arith.andi %19, %22 : vector<16x16xi1>
      %c0 = arith.constant 0 : index
      %c0_6 = arith.constant 0 : index
      %c0_7 = arith.constant 0 : index
      %c0_8 = arith.constant 0 : index
      %24 = vector.load %arg3[%c0, %c0_6, %c0_7, %c0_8] : memref<1x1x16x128xf32, #tpu.memory_space<vmem>>, vector<1x1x16x128xf32>
      %25 = vector.shape_cast %24 : vector<1x1x16x128xf32> to vector<16x128xf32>
      %c0_9 = arith.constant 0 : index
      %c0_10 = arith.constant 0 : index
      %c0_11 = arith.constant 0 : index
      %c0_12 = arith.constant 0 : index
      %26 = vector.load %arg4[%c0_9, %c0_10, %c0_11, %c0_12] : memref<1x1x16x128xf32, #tpu.memory_space<vmem>>, vector<1x1x16x128xf32>
      %27 = vector.shape_cast %26 : vector<1x1x16x128xf32> to vector<16x128xf32>
      %c0_13 = arith.constant 0 : index
      %c0_14 = arith.constant 0 : index
      %c0_15 = arith.constant 0 : index
      %c0_16 = arith.constant 0 : index
      %28 = vector.load %arg5[%c0_13, %c0_14, %c0_15, %c0_16] : memref<1x1x16x128xf32, #tpu.memory_space<vmem>>, vector<1x1x16x128xf32>
      %29 = vector.shape_cast %28 : vector<1x1x16x128xf32> to vector<16x128xf32>
      %cst = arith.constant dense<0.000000e+00> : vector<16x16xf32>
      %30 = tpu.matmul %25, %27, %cst {dimension_numbers = #tpu.dot_dimension_numbers<[1], [1], [0], [0], [0, 0, 1, 0], [], []>} : vector<16x128xf32>, vector<16x128xf32>, vector<16x16xf32> -> vector<16x16xf32>
      %cst_17 = arith.constant 1.200000e-01 : f32
      %31 = vector.broadcast %cst_17 : f32 to vector<16x16xf32>
      %32 = arith.mulf %30, %31 : vector<16x16xf32>
      %cst_18 = arith.constant -1.000000e+30 : f32
      %33 = vector.broadcast %cst_18 : f32 to vector<16x16xf32>
      %34 = arith.select %23, %32, %33 : vector<16x16xi1>, vector<16x16xf32>
      %c0_19 = arith.constant 0 : index
      %c0_20 = arith.constant 0 : index
      %c0_21 = arith.constant 0 : index
      %35 = vector.load %arg9[%c0_19, %c0_20, %c0_21] : memref<1x16x1xf32, #tpu.memory_space<vmem>>, vector<1x16x1xf32>
      %36 = vector.shape_cast %35 : vector<1x16x1xf32> to vector<16x1xf32>
      %cst_22 = arith.constant dense<0xFF800000> : vector<16xf32>
      %37 = vector.multi_reduction <maximumf>, %34, %cst_22 [1] : vector<16x16xf32> to vector<16xf32>
      %38 = vector.shape_cast %37 : vector<16xf32> to vector<16x1xf32>
      %39 = arith.maximumf %36, %38 : vector<16x1xf32>
      %40 = arith.subf %36, %39 : vector<16x1xf32>
      %41 = math.exp %40 : vector<16x1xf32>
      %42 = vector.broadcast %39 : vector<16x1xf32> to vector<16x16xf32>
      %43 = arith.subf %34, %42 : vector<16x16xf32>
      %44 = math.exp %43 : vector<16x16xf32>
      %c0_23 = arith.constant 0 : index
      %c0_24 = arith.constant 0 : index
      %c0_25 = arith.constant 0 : index
      %45 = vector.load %arg10[%c0_23, %c0_24, %c0_25] : memref<1x16x1xf32, #tpu.memory_space<vmem>>, vector<1x16x1xf32>
      %46 = vector.shape_cast %45 : vector<1x16x1xf32> to vector<16x1xf32>
      %47 = arith.mulf %41, %46 : vector<16x1xf32>
      %cst_26 = arith.constant dense<0.000000e+00> : vector<16xf32>
      %48 = vector.multi_reduction <add>, %44, %cst_26 [1] : vector<16x16xf32> to vector<16xf32>
      %49 = vector.shape_cast %48 : vector<16xf32> to vector<16x1xf32>
      %50 = arith.addf %47, %49 : vector<16x1xf32>
      %c0_27 = arith.constant 0 : index
      %c0_28 = arith.constant 0 : index
      %c0_29 = arith.constant 0 : index
      %51 = vector.load %arg10[%c0_27, %c0_28, %c0_29] : memref<1x16x1xf32, #tpu.memory_space<vmem>>, vector<1x16x1xf32>
      %52 = vector.shape_cast %51 : vector<1x16x1xf32> to vector<16x1xf32>
      %53 = vector.shape_cast %50 : vector<16x1xf32> to vector<1x16x1xf32>
      tpu.vector_store %arg10[%c0_27, %c0_28, %c0_29], %53 {strides = array<i32>} : memref<1x16x1xf32, #tpu.memory_space<vmem>>, vector<1x16x1xf32>,
      %c0_30 = arith.constant 0 : index
      %c0_31 = arith.constant 0 : index
      %c0_32 = arith.constant 0 : index
      %54 = vector.load %arg11[%c0_30, %c0_31, %c0_32] : memref<1x16x128xf32, #tpu.memory_space<vmem>>, vector<1x16x128xf32>
      %55 = vector.shape_cast %54 : vector<1x16x128xf32> to vector<16x128xf32>
      %56 = vector.broadcast %41 : vector<16x1xf32> to vector<16x128xf32>
      %57 = arith.mulf %56, %55 : vector<16x128xf32>
      %cst_33 = arith.constant dense<0.000000e+00> : vector<16x128xf32>
      %58 = tpu.matmul %44, %29, %cst_33 {dimension_numbers = #tpu.dot_dimension_numbers<[1], [0], [0], [1], [0, 0, 1, 1], [], []>} : vector<16x16xf32>, vector<16x128xf32>, vector<16x128xf32> -> vector<16x128xf32>
      %59 = arith.addf %57, %58 : vector<16x128xf32>
      %c0_34 = arith.constant 0 : index
      %c0_35 = arith.constant 0 : index
      %c0_36 = arith.constant 0 : index
      %60 = vector.load %arg11[%c0_34, %c0_35, %c0_36] : memref<1x16x128xf32, #tpu.memory_space<vmem>>, vector<1x16x128xf32>
      %61 = vector.shape_cast %60 : vector<1x16x128xf32> to vector<16x128xf32>
      %62 = vector.shape_cast %59 : vector<16x128xf32> to vector<1x16x128xf32>
      tpu.vector_store %arg11[%c0_34, %c0_35, %c0_36], %62 {strides = array<i32>} : memref<1x16x128xf32, #tpu.memory_space<vmem>>, vector<1x16x128xf32>,
      %c0_37 = arith.constant 0 : index
      %c0_38 = arith.constant 0 : index
      %c0_39 = arith.constant 0 : index
      %63 = vector.load %arg9[%c0_37, %c0_38, %c0_39] : memref<1x16x1xf32, #tpu.memory_space<vmem>>, vector<1x16x1xf32>
      %64 = vector.shape_cast %63 : vector<1x16x1xf32> to vector<16x1xf32>
      %65 = vector.shape_cast %39 : vector<16x1xf32> to vector<1x16x1xf32>
      tpu.vector_store %arg9[%c0_37, %c0_38, %c0_39], %65 {strides = array<i32>} : memref<1x16x1xf32, #tpu.memory_space<vmem>>, vector<1x16x1xf32>,
    } else {
    }
    %c1_i32_3 = arith.constant 1 : i32
    %8 = arith.cmpi eq, %arg2, %c1_i32_3 : i32
    %9 = arith.extui %8 : i1 to i32
    %c0_i32_4 = arith.constant 0 : i32
    %10 = arith.cmpi ne, %9, %c0_i32_4 : i32
    scf.if %10 {
      %c0 = arith.constant 0 : index
      %c0_5 = arith.constant 0 : index
      %c0_6 = arith.constant 0 : index
      %11 = vector.load %arg10[%c0, %c0_5, %c0_6] : memref<1x16x1xf32, #tpu.memory_space<vmem>>, vector<1x16x1xf32>
      %12 = vector.shape_cast %11 : vector<1x16x1xf32> to vector<16x1xf32>
      %13 = tpu.reciprocal %12 {approx = true} : vector<16x1xf32> -> vector<16x1xf32>
      %14 = arith.mulf %12, %13 : vector<16x1xf32>
      %cst = arith.constant 2.000000e+00 : f32
      %15 = vector.broadcast %cst : f32 to vector<16x1xf32>
      %16 = arith.subf %15, %14 : vector<16x1xf32>
      %17 = arith.mulf %13, %16 : vector<16x1xf32>
      %c0_7 = arith.constant 0 : index
      %c0_8 = arith.constant 0 : index
      %c0_9 = arith.constant 0 : index
      %18 = vector.load %arg11[%c0_7, %c0_8, %c0_9] : memref<1x16x128xf32, #tpu.memory_space<vmem>>, vector<1x16x128xf32>
      %19 = vector.shape_cast %18 : vector<1x16x128xf32> to vector<16x128xf32>
      %20 = vector.broadcast %17 : vector<16x1xf32> to vector<16x128xf32>
      %21 = arith.mulf %19, %20 : vector<16x128xf32>
      %c0_10 = arith.constant 0 : index
      %c0_11 = arith.constant 0 : index
      %22 = vector.load %arg7[%c0_10, %c0_11] : memref<128x128xf32, #tpu.memory_space<vmem>>, vector<128x128xf32>
      %cst_12 = arith.constant dense<0.000000e+00> : vector<16x128xf32>
      %23 = tpu.matmul %21, %22, %cst_12 {dimension_numbers = #tpu.dot_dimension_numbers<[1], [0], [0], [1], [0, 0, 1, 1], [], []>} : vector<16x128xf32>, vector<128x128xf32>, vector<16x128xf32> -> vector<16x128xf32>
      %c0_13 = arith.constant 0 : index
      %c0_14 = arith.constant 0 : index
      %c0_15 = arith.constant 0 : index
      %24 = vector.load %arg6[%c0_13, %c0_14, %c0_15] : memref<1x16x128xf32, #tpu.memory_space<vmem>>, vector<1x16x128xf32>
      %25 = vector.shape_cast %24 : vector<1x16x128xf32> to vector<16x128xf32>
      %26 = arith.addf %25, %23 : vector<16x128xf32>
      %c0_16 = arith.constant 0 : index
      %c0_17 = arith.constant 0 : index
      %c0_18 = arith.constant 0 : index
      %27 = vector.load %arg8[%c0_16, %c0_17, %c0_18] : memref<1x16x128xf32, #tpu.memory_space<vmem>>, vector<1x16x128xf32>
      %28 = vector.shape_cast %27 : vector<1x16x128xf32> to vector<16x128xf32>
      %29 = vector.shape_cast %26 : vector<16x128xf32> to vector<1x16x128xf32>
      tpu.vector_store %arg8[%c0_16, %c0_17, %c0_18], %29 {strides = array<i32>} : memref<1x16x128xf32, #tpu.memory_space<vmem>>, vector<1x16x128xf32>,
    } else {
    }
    return
  }
  func.func @transform_0(%arg0: i32, %arg1: i32, %arg2: i32) -> (i32, i32, i32, i32) {
    %c0_i32 = arith.constant 0 : i32
    %c0_i32_0 = arith.constant 0 : i32
    %c0_i32_1 = arith.constant 0 : i32
    return %arg0, %c0_i32, %arg1, %c0_i32_0 : i32, i32, i32, i32
  }
  func.func @transform_1(%arg0: i32, %arg1: i32, %arg2: i32) -> (i32, i32, i32, i32) {
    %c1_i32 = arith.constant 1 : i32
    %0 = arith.subi %arg1, %c1_i32 : i32
    %1 = arith.addi %0, %arg2 : i32
    %c0_i32 = arith.constant 0 : i32
    %2 = arith.maxsi %1, %c0_i32 : i32
    %c0_i32_0 = arith.constant 0 : i32
    %c0_i32_1 = arith.constant 0 : i32
    %c0_i32_2 = arith.constant 0 : i32
    return %arg0, %c0_i32_0, %2, %c0_i32_1 : i32, i32, i32, i32
  }
  func.func @transform_2(%arg0: i32, %arg1: i32, %arg2: i32) -> (i32, i32, i32, i32) {
    %c1_i32 = arith.constant 1 : i32
    %0 = arith.subi %arg1, %c1_i32 : i32
    %1 = arith.addi %0, %arg2 : i32
    %c0_i32 = arith.constant 0 : i32
    %2 = arith.maxsi %1, %c0_i32 : i32
    %c0_i32_0 = arith.constant 0 : i32
    %c0_i32_1 = arith.constant 0 : i32
    %c0_i32_2 = arith.constant 0 : i32
    return %arg0, %c0_i32_0, %2, %c0_i32_1 : i32, i32, i32, i32
  }
  func.func @transform_3(%arg0: i32, %arg1: i32, %arg2: i32) -> (i32, i32, i32) {
    %c0_i32 = arith.constant 0 : i32
    %c0_i32_0 = arith.constant 0 : i32
    return %arg0, %arg1, %c0_i32 : i32, i32, i32
  }
  func.func @transform_4(%arg0: i32, %arg1: i32, %arg2: i32) -> (i32, i32) {
    %c0_i32 = arith.constant 0 : i32
    %c0_i32_0 = arith.constant 0 : i32
    %c0_i32_1 = arith.constant 0 : i32
    return %c0_i32, %c0_i32_0 : i32, i32
  }
  func.func @transform_5(%arg0: i32, %arg1: i32, %arg2: i32) -> (i32, i32, i32) {
    %c0_i32 = arith.constant 0 : i32
    %c0_i32_0 = arith.constant 0 : i32
    return %arg0, %arg1, %c0_i32 : i32, i32, i32
  }
}

</mosaic_0001>

<llo_original>
// kernel: byte_mixout_forward.2
$region0: #{byte_mixout_forward.2}
  #allocation0 [shape = 'u32[]', space=smem, size = 0x4, offset = 0x4, fixed_abs, tag = 'smem constant byte address 0x4 - core index']
  #allocation1 [shape = 'u32[72,128]{1,0:T(1,128)}', space=vmem, size = 0x9000, scoped, tag = 'internal scratch']
  %s0 = inlined_call_operand.vmem [shape: f32[2], index: 0, kind: input, shape index: {}]
  %s1 = inlined_call_operand.hbm [shape: f32[2,8,128], index: 1, kind: input, shape index: {}]
  %s2 = inlined_call_operand.hbm [shape: f32[128,384], index: 2, kind: input, shape index: {}]
  %s3 = inlined_call_operand.hbm [shape: f32[32,128], index: 3, kind: input, shape index: {}]
  %s4 = inlined_call_operand.hbm [shape: f32[32,128], index: 4, kind: input, shape index: {}]
  %s5 = inlined_call_operand.vmem [shape: f32[2,32,128], index: 5, kind: output, shape index: {0}]
  %s6 = inlined_call_operand.vmem [shape: f32[2,1,32,128], index: 6, kind: output, shape index: {1}]
  %s7 = inlined_call_operand.vmem [shape: f32[2,1,32,128], index: 7, kind: output, shape index: {2}]
  %s8 = inlined_call_operand.vmem [shape: f32[2,1,32,128], index: 8, kind: output, shape index: {3}]
  %9 = xla_tuple %s5, %s6, %s7, %s8
  %s10 = sld [smem:[#allocation0]]
  $region97: #{byte_mixout_forward.2} parent=0
    _
  %s12 = ssub.s32 1, %s10
  %s13 = scalar_select 0, %s12, %s10
  $region1: #{byte_mixout_forward.2} parent=0
    #allocation2 [shape = 'u8[512]{0}', space=smem, size = 0x200, scoped, tag = 'input window, operand 0, single buffered']
    #allocation3 [shape = 's32[2]{0}', space=sflag, size = 0x8, scoped, tag = 'scoped memory for byte_mixout_forward.2']
    #allocation4 [shape = 's32[2]{0}', space=sflag, size = 0x8, scoped, tag = 'scoped memory for byte_mixout_forward.2']
    #allocation5 [shape = 'u8[8192]{0}', space=vmem, size = 0x2000, scoped, tag = 'input window, operand 1']
    #allocation6 [shape = 'u8[196608]{0}', space=vmem, size = 0x30000, scoped, tag = 'input window, operand 2, single buffered']
    #allocation7 [shape = 's32[1]{0}', space=sflag, size = 0x4, scoped, tag = 'scoped memory for byte_mixout_forward.2']
    #allocation8 [shape = 'u8[16384]{0}', space=vmem, size = 0x4000, scoped, tag = 'input window, operand 3, single buffered']
    #allocation9 [shape = 'u8[16384]{0}', space=vmem, size = 0x4000, scoped, tag = 'input window, operand 4, single buffered']
    #allocation10 [shape = 's32[1]{0}', space=sflag, size = 0x4, scoped, tag = 'scoped memory for byte_mixout_forward.2']
    %14 = vsyncpa [#allocation4], 0
    %15 = vsyncpa [#allocation3], 0
    %s16 = scalar_lea.sflag [#allocation3], 1
    %17 = vsyncpa %s16, 0
    %18 = vsyncpa [#allocation7], 0
    %19 = vsyncpa [#allocation10], 0
    loop: start=0, step=1, limit=4
    $region2: #{byte_mixout_forward.2} parent=1 // loop_pre_header
      _
    $region3: #{byte_mixout_forward.2} parent=1 // loop_header
      %s21 = sphi 0, %s25
      %p22 = scmp.ge.s32.totalorder %s21, 4
      %s28 = sphi 0, %s40
      %s29 = sphi 0, %s36
      %s30 = sphi 0, %s28
      %s31 = sphi 0, %s29
      %s32 = sphi 0, %s30
      %s33 = sphi 0, %s31
      %s41 = sphi 0, %s41
      %s43 = sphi 0, %s41
      %s44 = sphi 0, %s43
      %s58 = sphi 0, %s44
      %s66 = sphi 0, %s68
      %s69 = sphi 0, %s66
      %s70 = sphi 0, %s69
      %s86 = sphi 0, %s70
      %s90 = sphi 0, %s90
      %s92 = sphi 0, %s90
      %s93 = sphi 0, %s92
      %s107 = sphi 0, %s93
      %s113 = sphi 0, %s115
      %s116 = sphi 0, %s113
      %s117 = sphi 0, %s116
      %s133 = sphi 0, %s117
      %s139 = sphi 0, %s141
      %s142 = sphi 0, %s139
      %s143 = sphi 0, %s142
      %s159 = sphi 0, %s143
      %s167 = sphi 0, %s169
      %s170 = sphi 0, %s167
      %s171 = sphi 0, %s170
      %s187 = sphi 0, %s171
      %s195 = sphi 0, %s197
      %s198 = sphi 0, %s195
      %s199 = sphi 0, %s198
      %s215 = sphi 0, %s199
      %s223 = sphi 0, %s225
      %s226 = sphi 0, %s223
      %s227 = sphi 0, %s226
      %s243 = sphi 0, %s227
      %s251 = sphi 0, %s253
      %s254 = sphi 0, %s251
      %s255 = sphi 0, %s254
      %s271 = sphi 0, %s255
    $region4: #{byte_mixout_forward.2} parent=1 // loop_header_branch
      %24 = sbr.rel (%p22) target = $region8
    $region5: #{byte_mixout_forward.2} parent=1 // loop_body
      %s26 = ssub.s32 %s21, 1
      %s27 = ssub.s32 %s21, 2
      %s34 = sadd.s32 1, %s29
      %p35 = scmp.ge.s32.totalorder %s34, 1
      %s36 = scalar_select %p35, 0, %s34
      %s37 = sadd.s32 1, %s28
      %s38 = scalar_select %p35, %s37, %s28
      %p39 = scmp.ge.s32.totalorder %s38, 2
      %s40 = scalar_select %p39, 0, %s38
      %s42 = sadd.s32 %s41, 1
      %p45 = scmp.eq.s32.totalorder %s21, 1
      %p46 = scmp.ne.s32.totalorder %s41, %s43
      %p47 = scmp.eq.s32.totalorder %s21, 0
      %p48 = por %p46, %p47
      %p49 = scmp.ne.s32.totalorder %s41, %s43
      %p50 = scmp.eq.s32.totalorder %s26, 1
      %p51 = por %p49, %p50
      %p52 = scmp.ne.s32.totalorder %s43, %s44
      %p53 = scmp.eq.s32.totalorder %s26, 0
      %p54 = por %p52, %p53
      %p55 = scmp.ne.s32.totalorder %s43, %s44
      %p56 = scmp.eq.s32.totalorder %s27, 1
      %p57 = por %p55, %p56
      %p59 = scmp.ne.s32.totalorder %s44, %s58
      %p60 = scmp.eq.s32.totalorder %s27, 0
      %p61 = por %p59, %p60
      %s62 = ssub.s32 %s28, %s40
      %s63 = ssub.s32 %s29, %s36
      %s64 = sor.u32 %s62, %s63
      %p65 = scmp.eq.s32.totalorder %s64, 0
      %s67 = sadd.s32 %s66, 1
      %s68 = scalar_select %p65, %s66, %s67
      %p71 = pneg %p65
      %p72 = scmp.eq.s32.totalorder %s21, 1
      %p73 = por %p71, %p72
      %p74 = scmp.ne.s32.totalorder %s66, %s69
      %p75 = scmp.eq.s32.totalorder %s21, 0
      %p76 = por %p74, %p75
      %p77 = scmp.ne.s32.totalorder %s66, %s69
      %p78 = scmp.eq.s32.totalorder %s26, 1
      %p79 = por %p77, %p78
      %p80 = scmp.ne.s32.totalorder %s69, %s70
      %p81 = scmp.eq.s32.totalorder %s26, 0
      %p82 = por %p80, %p81
      %p83 = scmp.ne.s32.totalorder %s69, %s70
      %p84 = scmp.eq.s32.totalorder %s27, 1
      %p85 = por %p83, %p84
      %p87 = scmp.ne.s32.totalorder %s70, %s86
      %p88 = scmp.eq.s32.totalorder %s27, 0
      %p89 = por %p87, %p88
      %s91 = sadd.s32 %s90, 1
      %p94 = scmp.eq.s32.totalorder %s21, 1
      %p95 = scmp.ne.s32.totalorder %s90, %s92
      %p96 = scmp.eq.s32.totalorder %s21, 0
      %p97 = por %p95, %p96
      %p98 = scmp.ne.s32.totalorder %s90, %s92
      %p99 = scmp.eq.s32.totalorder %s26, 1
      %p100 = por %p98, %p99
      %p101 = scmp.ne.s32.totalorder %s92, %s93
      %p102 = scmp.eq.s32.totalorder %s26, 0
      %p103 = por %p101, %p102
      %p104 = scmp.ne.s32.totalorder %s92, %s93
      %p105 = scmp.eq.s32.totalorder %s27, 1
      %p106 = por %p104, %p105
      %p108 = scmp.ne.s32.totalorder %s93, %s107
      %p109 = scmp.eq.s32.totalorder %s27, 0
      %p110 = por %p108, %p109
      %s111 = ssub.s32 %s29, %s36
      %p112 = scmp.eq.s32.totalorder %s111, 0
      %s114 = sadd.s32 %s113, 1
      %s115 = scalar_select %p112, %s113, %s114
      %p118 = pneg %p112
      %p119 = scmp.eq.s32.totalorder %s21, 1
      %p120 = por %p118, %p119
      %p121 = scmp.ne.s32.totalorder %s113, %s116
      %p122 = scmp.eq.s32.totalorder %s21, 0
      %p123 = por %p121, %p122
      %p124 = scmp.ne.s32.totalorder %s113, %s116
      %p125 = scmp.eq.s32.totalorder %s26, 1
      %p126 = por %p124, %p125
      %p127 = scmp.ne.s32.totalorder %s116, %s117
      %p128 = scmp.eq.s32.totalorder %s26, 0
      %p129 = por %p127, %p128
      %p130 = scmp.ne.s32.totalorder %s116, %s117
      %p131 = scmp.eq.s32.totalorder %s27, 1
      %p132 = por %p130, %p131
      %p134 = scmp.ne.s32.totalorder %s117, %s133
      %p135 = scmp.eq.s32.totalorder %s27, 0
      %p136 = por %p134, %p135
      %s137 = ssub.s32 %s29, %s36
      %p138 = scmp.eq.s32.totalorder %s137, 0
      %s140 = sadd.s32 %s139, 1
      %s141 = scalar_select %p138, %s139, %s140
      %p144 = pneg %p138
      %p145 = scmp.eq.s32.totalorder %s21, 1
      %p146 = por %p144, %p145
      %p147 = scmp.ne.s32.totalorder %s139, %s142
      %p148 = scmp.eq.s32.totalorder %s21, 0
      %p149 = por %p147, %p148
      %p150 = scmp.ne.s32.totalorder %s139, %s142
      %p151 = scmp.eq.s32.totalorder %s26, 1
      %p152 = por %p150, %p151
      %p153 = scmp.ne.s32.totalorder %s142, %s143
      %p154 = scmp.eq.s32.totalorder %s26, 0
      %p155 = por %p153, %p154
      %p156 = scmp.ne.s32.totalorder %s142, %s143
      %p157 = scmp.eq.s32.totalorder %s27, 1
      %p158 = por %p156, %p157
      %p160 = scmp.ne.s32.totalorder %s143, %s159
      %p161 = scmp.eq.s32.totalorder %s27, 0
      %p162 = por %p160, %p161
      %s163 = ssub.s32 %s28, %s40
      %s164 = ssub.s32 %s29, %s36
      %s165 = sor.u32 %s163, %s164
      %p166 = scmp.eq.s32.totalorder %s165, 0
      %s168 = sadd.s32 %s167, 1
      %s169 = scalar_select %p166, %s167, %s168
      %p172 = pneg %p166
      %p173 = scmp.eq.s32.totalorder %s21, 1
      %p174 = por %p172, %p173
      %p175 = scmp.ne.s32.totalorder %s167, %s170
      %p176 = scmp.eq.s32.totalorder %s21, 0
      %p177 = por %p175, %p176
      %p178 = scmp.ne.s32.totalorder %s167, %s170
      %p179 = scmp.eq.s32.totalorder %s26, 1
      %p180 = por %p178, %p179
      %p181 = scmp.ne.s32.totalorder %s170, %s171
      %p182 = scmp.eq.s32.totalorder %s26, 0
      %p183 = por %p181, %p182
      %p184 = scmp.ne.s32.totalorder %s170, %s171
      %p185 = scmp.eq.s32.totalorder %s27, 1
      %p186 = por %p184, %p185
      %p188 = scmp.ne.s32.totalorder %s171, %s187
      %p189 = scmp.eq.s32.totalorder %s27, 0
      %p190 = por %p188, %p189
      %s191 = ssub.s32 %s28, %s40
      %s192 = ssub.s32 %s29, %s36
      %s193 = sor.u32 %s191, %s192
      %p194 = scmp.eq.s32.totalorder %s193, 0
      %s196 = sadd.s32 %s195, 1
      %s197 = scalar_select %p194, %s195, %s196
      %p200 = pneg %p194
      %p201 = scmp.eq.s32.totalorder %s21, 1
      %p202 = por %p200, %p201
      %p203 = scmp.ne.s32.totalorder %s195, %s198
      %p204 = scmp.eq.s32.totalorder %s21, 0
      %p205 = por %p203, %p204
      %p206 = scmp.ne.s32.totalorder %s195, %s198
      %p207 = scmp.eq.s32.totalorder %s26, 1
      %p208 = por %p206, %p207
      %p209 = scmp.ne.s32.totalorder %s198, %s199
      %p210 = scmp.eq.s32.totalorder %s26, 0
      %p211 = por %p209, %p210
      %p212 = scmp.ne.s32.totalorder %s198, %s199
      %p213 = scmp.eq.s32.totalorder %s27, 1
      %p214 = por %p212, %p213
      %p216 = scmp.ne.s32.totalorder %s199, %s215
      %p217 = scmp.eq.s32.totalorder %s27, 0
      %p218 = por %p216, %p217
      %s219 = ssub.s32 %s28, %s40
      %s220 = ssub.s32 %s29, %s36
      %s221 = sor.u32 %s219, %s220
      %p222 = scmp.eq.s32.totalorder %s221, 0
      %s224 = sadd.s32 %s223, 1
      %s225 = scalar_select %p222, %s223, %s224
      %p228 = pneg %p222
      %p229 = scmp.eq.s32.totalorder %s21, 1
      %p230 = por %p228, %p229
      %p231 = scmp.ne.s32.totalorder %s223, %s226
      %p232 = scmp.eq.s32.totalorder %s21, 0
      %p233 = por %p231, %p232
      %p234 = scmp.ne.s32.totalorder %s223, %s226
      %p235 = scmp.eq.s32.totalorder %s26, 1
      %p236 = por %p234, %p235
      %p237 = scmp.ne.s32.totalorder %s226, %s227
      %p238 = scmp.eq.s32.totalorder %s26, 0
      %p239 = por %p237, %p238
      %p240 = scmp.ne.s32.totalorder %s226, %s227
      %p241 = scmp.eq.s32.totalorder %s27, 1
      %p242 = por %p240, %p241
      %p244 = scmp.ne.s32.totalorder %s227, %s243
      %p245 = scmp.eq.s32.totalorder %s27, 0
      %p246 = por %p244, %p245
      %s247 = ssub.s32 %s28, %s40
      %s248 = ssub.s32 %s29, %s36
      %s249 = sor.u32 %s247, %s248
      %p250 = scmp.eq.s32.totalorder %s249, 0
      %s252 = sadd.s32 %s251, 1
      %s253 = scalar_select %p250, %s251, %s252
      %p256 = pneg %p250
      %p257 = scmp.eq.s32.totalorder %s21, 1
      %p258 = por %p256, %p257
      %p259 = scmp.ne.s32.totalorder %s251, %s254
      %p260 = scmp.eq.s32.totalorder %s21, 0
      %p261 = por %p259, %p260
      %p262 = scmp.ne.s32.totalorder %s251, %s254
      %p263 = scmp.eq.s32.totalorder %s26, 1
      %p264 = por %p262, %p263
      %p265 = scmp.ne.s32.totalorder %s254, %s255
      %p266 = scmp.eq.s32.totalorder %s26, 0
      %p267 = por %p265, %p266
      %p268 = scmp.ne.s32.totalorder %s254, %s255
      %p269 = scmp.eq.s32.totalorder %s27, 1
      %p270 = por %p268, %p269
      %p272 = scmp.ne.s32.totalorder %s255, %s271
      %p273 = scmp.eq.s32.totalorder %s27, 0
      %p274 = por %p272, %p273
      %p275 = scmp.le.s32.totalorder 1, %s21
      %p276 = scmp.lt.s32.totalorder %s21, 3
      %p277 = pnand %p275, %p276
      %p278 = pneg %p277
      // Predicated region
      $region9: #{byte_mixout_forward.2} parent=5 // pred_check
        _
      $region10: #{byte_mixout_forward.2} parent=5 // pred_check_branch
        %280 = sbr.rel (%p277) target = $region12
      $region11: #{byte_mixout_forward.2} parent=5 // pred_region
        %s281 = ssub.s32 %s21, 1
        // Predicated region
        $region13: #{byte_mixout_forward.2} parent=11 // pred_check
          %p282 = pneg %p54
        $region14: #{byte_mixout_forward.2} parent=11 // pred_check_branch
          %284 = sbr.rel (%p282) target = $region16
        $region15: #{byte_mixout_forward.2} parent=11 // pred_region
          %286 = vsyncadd [#allocation4], 0
          %s288 = sshll.u32 %s0, 4
          %s289 = int_to_ptr.vmem [resolvable:$true] %s288
          %291 = dma.vmem_to_smem %s289, 16, [#allocation2], [#allocation4]
        $region16: #{byte_mixout_forward.2} parent=11 // pred_fallthru
          _
        // Predicated region
        $region17: #{byte_mixout_forward.2} parent=11 // pred_check
          %p292 = pneg %p103
        $region18: #{byte_mixout_forward.2} parent=11 // pred_check_branch
          %294 = sbr.rel (%p292) target = $region20
        $region19: #{byte_mixout_forward.2} parent=11 // pred_region
          %296 = vsyncadd [#allocation7], 0
          %s297 = sshll.u32 %s2, 4
          %s298 = int_to_ptr.hbm [resolvable:$true] %s297
          %s299 = sshll.u32 [#allocation6], 4
          %s300 = int_to_ptr.vmem [resolvable:$true] %s299
          %305 = dma.hbm_to_vmem [thread:$0]  %s298, 6144, %s300, [#allocation7], 384, 384, 24
        $region20: #{byte_mixout_forward.2} parent=11 // pred_fallthru
          _
        // Predicated region
        $region21: #{byte_mixout_forward.2} parent=11 // pred_check
          %p306 = pneg %p129
        $region22: #{byte_mixout_forward.2} parent=11 // pred_check_branch
          %308 = sbr.rel (%p306) target = $region24
        $region23: #{byte_mixout_forward.2} parent=11 // pred_region
          %s309 = smul.u32 4, %s31
          %311 = vsyncadd [#allocation7], 0
          %s312 = smul.addr %s309, 8
          %s313 = scalar_lea.hbm %s3, %s312
          %s314 = sshll.u32 %s313, 4
          %s315 = int_to_ptr.hbm [resolvable:$true] %s314
          %s316 = sshll.u32 [#allocation8], 4
          %s317 = int_to_ptr.vmem [resolvable:$true] %s316
          %322 = dma.hbm_to_vmem [thread:$0]  %s315, 512, %s317, [#allocation7], 128, 128, 8
        $region24: #{byte_mixout_forward.2} parent=11 // pred_fallthru
          _
        // Predicated region
        $region25: #{byte_mixout_forward.2} parent=11 // pred_check
          %p323 = pneg %p155
        $region26: #{byte_mixout_forward.2} parent=11 // pred_check_branch
          %325 = sbr.rel (%p323) target = $region28
        $region27: #{byte_mixout_forward.2} parent=11 // pred_region
          %s326 = smul.u32 4, %s31
          %328 = vsyncadd [#allocation10], 0
          %s329 = smul.addr %s326, 8
          %s330 = scalar_lea.hbm %s4, %s329
          %s331 = sshll.u32 %s330, 4
          %s332 = int_to_ptr.hbm [resolvable:$true] %s331
          %s333 = sshll.u32 [#allocation9], 4
          %s334 = int_to_ptr.vmem [resolvable:$true] %s333
          %339 = dma.hbm_to_vmem [thread:$0]  %s332, 512, %s334, [#allocation10], 128, 128, 8
        $region28: #{byte_mixout_forward.2} parent=11 // pred_fallthru
          _
      $region12: #{byte_mixout_forward.2} parent=5 // pred_fallthru
        _
      %p340 = scmp.lt.s32.totalorder %s21, 2
      // Predicated region
      $region29: #{byte_mixout_forward.2} parent=5 // pred_check
        %p341 = pneg %p340
      $region30: #{byte_mixout_forward.2} parent=5 // pred_check_branch
        %343 = sbr.rel (%p341) target = $region32
      $region31: #{byte_mixout_forward.2} parent=5 // pred_region
        // Predicated region
        $region33: #{byte_mixout_forward.2} parent=31 // pred_check
          %p344 = pneg %p76
        $region34: #{byte_mixout_forward.2} parent=31 // pred_check_branch
          %346 = sbr.rel (%p344) target = $region36
        $region35: #{byte_mixout_forward.2} parent=31 // pred_region
          %s347 = sand.u32 %s66, 1
          %s348 = scalar_lea.sflag [#allocation3], %s347
          %s349 = sand.u32 %s66, 1
          %s350 = smul.addr %s349, 8
          %s351 = scalar_lea.vmem [#allocation5], %s350
          %353 = vsyncadd %s348, 0
          %s354 = sadd.s32 %s29, %s28
          %s355 = smul.addr %s354, 8
          %s356 = scalar_lea.hbm %s1, %s355
          %s358 = sshll.u32 %s356, 4
          %s359 = int_to_ptr.hbm [resolvable:$true] %s358
          %s360 = sshll.u32 %s351, 4
          %s361 = int_to_ptr.vmem [resolvable:$true] %s360
          %363 = dma.hbm_to_vmem [thread:$0]  %s359, 128, %s361, %s348
        $region36: #{byte_mixout_forward.2} parent=31 // pred_fallthru
          _
      $region32: #{byte_mixout_forward.2} parent=5 // pred_fallthru
        _
      %p364 = scmp.le.s32.totalorder 1, %s21
      %p365 = scmp.lt.s32.totalorder %s21, 3
      %p366 = pnand %p364, %p365
      %p367 = pneg %p366
      // Predicated region
      $region37: #{byte_mixout_forward.2} parent=5 // pred_check
        _
      $region38: #{byte_mixout_forward.2} parent=5 // pred_check_branch
        %369 = sbr.rel (%p366) target = $region40
      $region39: #{byte_mixout_forward.2} parent=5 // pred_region
        %s370 = ssub.s32 %s21, 1
        // Predicated region
        $region41: #{byte_mixout_forward.2} parent=39 // pred_check
          %p371 = pneg %p54
        $region42: #{byte_mixout_forward.2} parent=39 // pred_check_branch
          %373 = sbr.rel (%p371) target = $region44
        $region43: #{byte_mixout_forward.2} parent=39 // pred_region
          %375 = dma.done [#allocation4], 16
        $region44: #{byte_mixout_forward.2} parent=39 // pred_fallthru
          _
        %s376 = sand.u32 %s69, 1
        %s377 = scalar_lea.sflag [#allocation3], %s376
        %s378 = sand.u32 %s69, 1
        %s379 = smul.addr %s378, 8
        %s380 = scalar_lea.vmem [#allocation5], %s379
        // Predicated region
        $region45: #{byte_mixout_forward.2} parent=39 // pred_check
          %p381 = pneg %p82
        $region46: #{byte_mixout_forward.2} parent=39 // pred_check_branch
          %383 = sbr.rel (%p381) target = $region48
        $region47: #{byte_mixout_forward.2} parent=39 // pred_region
          %385 = dma.done %s377, 128
        $region48: #{byte_mixout_forward.2} parent=39 // pred_fallthru
          _
        // Predicated region
        $region49: #{byte_mixout_forward.2} parent=39 // pred_check
          %p386 = pneg %p103
        $region50: #{byte_mixout_forward.2} parent=39 // pred_check_branch
          %388 = sbr.rel (%p386) target = $region52
        $region51: #{byte_mixout_forward.2} parent=39 // pred_region
          %390 = dma.done [#allocation7], 6144
        $region52: #{byte_mixout_forward.2} parent=39 // pred_fallthru
          _
        // Predicated region
        $region53: #{byte_mixout_forward.2} parent=39 // pred_check
          %p391 = pneg %p129
        $region54: #{byte_mixout_forward.2} parent=39 // pred_check_branch
          %393 = sbr.rel (%p391) target = $region56
        $region55: #{byte_mixout_forward.2} parent=39 // pred_region
          %395 = dma.done [#allocation7], 512
        $region56: #{byte_mixout_forward.2} parent=39 // pred_fallthru
          _
        // Predicated region
        $region57: #{byte_mixout_forward.2} parent=39 // pred_check
          %p396 = pneg %p155
        $region58: #{byte_mixout_forward.2} parent=39 // pred_check_branch
          %398 = sbr.rel (%p396) target = $region60
        $region59: #{byte_mixout_forward.2} parent=39 // pred_region
          %400 = dma.done [#allocation10], 512
        $region60: #{byte_mixout_forward.2} parent=39 // pred_fallthru
          _
        %401 = sfence
        %p402 = pneg %p54
        %p403 = pneg %p51
        %s404 = sand.u32 %s69, 1
        %s405 = scalar_lea.sflag [#allocation3], %s404
        %s406 = sand.u32 %s69, 1
        %s407 = smul.addr %s406, 8
        %s408 = scalar_lea.vmem [#allocation5], %s407
        %p409 = pneg %p82
        %p410 = pneg %p79
        %p411 = pneg %p103
        %p412 = pneg %p100
        %p413 = pneg %p129
        %p414 = pneg %p126
        %p415 = pneg %p155
        %p416 = pneg %p152
        %p417 = pneg %p183
        %p418 = pneg %p180
        %s419 = smul.u32 4, %s31
        %p420 = scmp.lt.s32.totalorder %s30, 1
        %s421 = scalar_select %p420, %s30, 1
        %p422 = scmp.lt.s32.totalorder %s419, 3
        %s423 = scalar_select %p422, %s419, 3
        %s424 = smul.addr %s421, 4
        %s425 = sadd.s32 %s423, %s424
        %s426 = smul.addr %s425, 8
        %s427 = scalar_lea.vmem %s5, %s426
        %p428 = pneg %p211
        %p429 = pneg %p208
        %s430 = smul.u32 4, %s31
        %p431 = scmp.lt.s32.totalorder %s30, 1
        %s432 = scalar_select %p431, %s30, 1
        %p433 = scmp.lt.s32.totalorder %s430, 3
        %s434 = scalar_select %p433, %s430, 3
        %s435 = smul.addr %s432, 4
        %s436 = sadd.s32 %s434, %s435
        %s437 = smul.addr %s436, 8
        %s438 = scalar_lea.vmem %s6, %s437
        %p439 = pneg %p239
        %p440 = pneg %p236
        %s441 = smul.u32 4, %s31
        %p442 = scmp.lt.s32.totalorder %s30, 1
        %s443 = scalar_select %p442, %s30, 1
        %p444 = scmp.lt.s32.totalorder %s441, 3
        %s445 = scalar_select %p444, %s441, 3
        %s446 = smul.addr %s443, 4
        %s447 = sadd.s32 %s445, %s446
        %s448 = smul.addr %s447, 8
        %s449 = scalar_lea.vmem %s7, %s448
        %p450 = pneg %p267
        %p451 = pneg %p264
        %s452 = smul.u32 4, %s31
        %p453 = scmp.lt.s32.totalorder %s30, 1
        %s454 = scalar_select %p453, %s30, 1
        %p455 = scmp.lt.s32.totalorder %s452, 3
        %s456 = scalar_select %p455, %s452, 3
        %s457 = smul.addr %s454, 4
        %s458 = sadd.s32 %s456, %s457
        %s459 = smul.addr %s458, 8
        %s460 = scalar_lea.vmem %s8, %s459
        %s461 = smul.u32 4, %s31
        %s462 = smul.u32 4, %s31
        %s463 = smul.u32 4, %s31
        %p464 = scmp.lt.s32.totalorder %s30, 1
        %s465 = scalar_select %p464, %s30, 1
        %p466 = scmp.lt.s32.totalorder %s463, 3
        %s467 = scalar_select %p466, %s463, 3
        %s468 = smul.addr %s465, 4
        %s469 = sadd.s32 %s467, %s468
        %s470 = smul.addr %s469, 8
        %s471 = scalar_lea.vmem %s5, %s470
        %s472 = smul.u32 4, %s31
        %s473 = smul.u32 4, %s31
        %p474 = scmp.lt.s32.totalorder %s30, 1
        %s475 = scalar_select %p474, %s30, 1
        %p476 = scmp.lt.s32.totalorder %s473, 3
        %s477 = scalar_select %p476, %s473, 3
        %s478 = smul.addr %s475, 4
        %s479 = sadd.s32 %s477, %s478
        %s480 = smul.addr %s479, 8
        %s481 = scalar_lea.vmem %s6, %s480
        %s482 = smul.u32 4, %s31
        %s483 = smul.u32 4, %s31
        %p484 = scmp.lt.s32.totalorder %s30, 1
        %s485 = scalar_select %p484, %s30, 1
        %p486 = scmp.lt.s32.totalorder %s483, 3
        %s487 = scalar_select %p486, %s483, 3
        %s488 = smul.addr %s485, 4
        %s489 = sadd.s32 %s487, %s488
        %s490 = smul.addr %s489, 8
        %s491 = scalar_lea.vmem %s7, %s490
        %s492 = smul.u32 4, %s31
        %s493 = smul.u32 4, %s31
        %p494 = scmp.lt.s32.totalorder %s30, 1
        %s495 = scalar_select %p494, %s30, 1
        %p496 = scmp.lt.s32.totalorder %s493, 3
        %s497 = scalar_select %p496, %s493, 3
        %s498 = smul.addr %s495, 4
        %s499 = sadd.s32 %s497, %s498
        %s500 = smul.addr %s499, 8
        %s501 = scalar_lea.vmem %s8, %s500
        %s502 = smul.u32 4, %s31
        %s503 = sld [smem:[#allocation2]]
        %v504 = vld [vmem:[%s380] sm:$0xff]
        %v505 = vmul.f32 %v504, %v504
        %506 = vadd.xlane.f32.xlu0 %v505
        %v507 = vpop.xlane.xlu0 %506
        %v508 = vrcp.pop 128.0
        %v509 = vmul.f32 128.0, %v508
        %v510 = vsub.f32 1.0, %v509
        %v511 = vmul.f32 %v508, %v510
        %v512 = vadd.f32 %v508, %v511
        %vm513 = vweird.f32 %v508
        %v514 = vsel %vm513, %v508, %v512
        %v515 = vmul.f32 %v507, %v514
        %v516 = vadd.f32 %v515, 1.1920929e-07
        %v517 = vrsqrt.pop %v516
        %v518 = vmul.f32 %v517, %v516
        %v519 = vmul.f32 %v518, %v517
        %v520 = vmul.f32 0.5, %v519
        %v521 = vsub.f32 1.5, %v520
        %v522 = vmul.f32 %v517, %v521
        %vm523 = vweird.f32 %v516
        %vm524 = vweird.f32 %v517
        %vm525 = vmor %vm523, %vm524
        %v526 = vsel %vm525, %v517, %v522
        %v527 = vmul.f32 %v504, %v526
        %v528 = vadd.f32 %v504, %v527
        %v529 = vld [vmem:[#allocation6] sm:$0xff]
        %v530 = vld [vmem:[#allocation6 + $0x8] sm:$0xff]
        %v531 = vld [vmem:[#allocation6 + $0x10] sm:$0xff]
        %v532 = vld [vmem:[#allocation6 + $0x18] sm:$0xff]
        %v533 = vld [vmem:[#allocation6 + $0x20] sm:$0xff]
        %v534 = vld [vmem:[#allocation6 + $0x28] sm:$0xff]
        %v535 = vld [vmem:[#allocation6 + $0x30] sm:$0xff]
        %v536 = vld [vmem:[#allocation6 + $0x38] sm:$0xff]
        %v537 = vld [vmem:[#allocation6 + $0x40] sm:$0xff]
        %v538 = vld [vmem:[#allocation6 + $0x48] sm:$0xff]
        %v539 = vld [vmem:[#allocation6 + $0x50] sm:$0xff]
        %v540 = vld [vmem:[#allocation6 + $0x58] sm:$0xff]
        %v541 = vld [vmem:[#allocation6 + $0x60] sm:$0xff]
        %v542 = vld [vmem:[#allocation6 + $0x68] sm:$0xff]
        %v543 = vld [vmem:[#allocation6 + $0x70] sm:$0xff]
        %v544 = vld [vmem:[#allocation6 + $0x78] sm:$0xff]
        %v545 = vld [vmem:[#allocation6 + $0x80] sm:$0xff]
        %v546 = vld [vmem:[#allocation6 + $0x88] sm:$0xff]
        %v547 = vld [vmem:[#allocation6 + $0x90] sm:$0xff]
        %v548 = vld [vmem:[#allocation6 + $0x98] sm:$0xff]
        %v549 = vld [vmem:[#allocation6 + $0xa0] sm:$0xff]
        %v550 = vld [vmem:[#allocation6 + $0xa8] sm:$0xff]
        %v551 = vld [vmem:[#allocation6 + $0xb0] sm:$0xff]
        %v552 = vld [vmem:[#allocation6 + $0xb8] sm:$0xff]
        %v553 = vld [vmem:[#allocation6 + $0xc0] sm:$0xff]
        %v554 = vld [vmem:[#allocation6 + $0xc8] sm:$0xff]
        %v555 = vld [vmem:[#allocation6 + $0xd0] sm:$0xff]
        %v556 = vld [vmem:[#allocation6 + $0xd8] sm:$0xff]
        %v557 = vld [vmem:[#allocation6 + $0xe0] sm:$0xff]
        %v558 = vld [vmem:[#allocation6 + $0xe8] sm:$0xff]
        %v559 = vld [vmem:[#allocation6 + $0xf0] sm:$0xff]
        %v560 = vld [vmem:[#allocation6 + $0xf8] sm:$0xff]
        %v561 = vld [vmem:[#allocation6 + $0x100] sm:$0xff]
        %v562 = vld [vmem:[#allocation6 + $0x108] sm:$0xff]
        %v563 = vld [vmem:[#allocation6 + $0x110] sm:$0xff]
        %v564 = vld [vmem:[#allocation6 + $0x118] sm:$0xff]
        %v565 = vld [vmem:[#allocation6 + $0x120] sm:$0xff]
        %v566 = vld [vmem:[#allocation6 + $0x128] sm:$0xff]
        %v567 = vld [vmem:[#allocation6 + $0x130] sm:$0xff]
        %v568 = vld [vmem:[#allocation6 + $0x138] sm:$0xff]
        %v569 = vld [vmem:[#allocation6 + $0x140] sm:$0xff]
        %v570 = vld [vmem:[#allocation6 + $0x148] sm:$0xff]
        %v571 = vld [vmem:[#allocation6 + $0x150] sm:$0xff]
        %v572 = vld [vmem:[#allocation6 + $0x158] sm:$0xff]
        %v573 = vld [vmem:[#allocation6 + $0x160] sm:$0xff]
        %v574 = vld [vmem:[#allocation6 + $0x168] sm:$0xff]
        %v575 = vld [vmem:[#allocation6 + $0x170] sm:$0xff]
        %v576 = vld [vmem:[#allocation6 + $0x178] sm:$0xff]
        %577 = vmatpush.msra.mxu0 %v574
        %578 = vmatpush.msra.mxu0 %v571
        %579 = vmatpush.msra.mxu0 %v568
        %580 = vmatpush.msra.mxu0 %v565
        %581 = vmatpush.msra.mxu0 %v562
        %582 = vmatpush.msra.mxu0 %v559
        %583 = vmatpush.msra.mxu0 %v556
        %584 = vmatpush.msra.mxu0 %v553
        %585 = vmatpush.msra.mxu0 %v550
        %586 = vmatpush.msra.mxu0 %v547
        %587 = vmatpush.msra.mxu0 %v544
        %588 = vmatpush.msra.mxu0 %v541
        %589 = vmatpush.msra.mxu0 %v538
        %590 = vmatpush.msra.mxu0 %v535
        %591 = vmatpush.msra.mxu0 %v532
        %592 = vmatpush.msra.mxu0 %v529
        %593 = vmatmul.f32.gmra.mxu0 %v527
        %v594 = vpop.f32.mrf.mxu0
        %v595 = vadd.f32 0.0, %v594
        %596 = vdwg.mxu0
        %597 = vmatpush.msra.mxu0 %v575
        %598 = vmatpush.msra.mxu0 %v572
        %599 = vmatpush.msra.mxu0 %v569
        %600 = vmatpush.msra.mxu0 %v566
        %601 = vmatpush.msra.mxu0 %v563
        %602 = vmatpush.msra.mxu0 %v560
        %603 = vmatpush.msra.mxu0 %v557
        %604 = vmatpush.msra.mxu0 %v554
        %605 = vmatpush.msra.mxu0 %v551
        %606 = vmatpush.msra.mxu0 %v548
        %607 = vmatpush.msra.mxu0 %v545
        %608 = vmatpush.msra.mxu0 %v542
        %609 = vmatpush.msra.mxu0 %v539
        %610 = vmatpush.msra.mxu0 %v536
        %611 = vmatpush.msra.mxu0 %v533
        %612 = vmatpush.msra.mxu0 %v530
        %613 = vmatmul.f32.gmra.mxu0 %v527
        %v614 = vpop.f32.mrf.mxu0
        %v615 = vadd.f32 0.0, %v614
        %616 = vdwg.mxu0
        %617 = vmatpush.msra.mxu0 %v576
        %618 = vmatpush.msra.mxu0 %v573
        %619 = vmatpush.msra.mxu0 %v570
        %620 = vmatpush.msra.mxu0 %v567
        %621 = vmatpush.msra.mxu0 %v564
        %622 = vmatpush.msra.mxu0 %v561
        %623 = vmatpush.msra.mxu0 %v558
        %624 = vmatpush.msra.mxu0 %v555
        %625 = vmatpush.msra.mxu0 %v552
        %626 = vmatpush.msra.mxu0 %v549
        %627 = vmatpush.msra.mxu0 %v546
        %628 = vmatpush.msra.mxu0 %v543
        %629 = vmatpush.msra.mxu0 %v540
        %630 = vmatpush.msra.mxu0 %v537
        %631 = vmatpush.msra.mxu0 %v534
        %632 = vmatpush.msra.mxu0 %v531
        %633 = vmatmul.f32.gmra.mxu0 %v527
        %v634 = vpop.f32.mrf.mxu0
        %v635 = vadd.f32 0.0, %v634
        %636 = vdwg.mxu0
        %v637 = vmul.f32 %v595, %v595
        %638 = vadd.xlane.f32.xlu0 %v637
        %v639 = vpop.xlane.xlu0 %638
        %v640 = vmul.f32 %v639, %v514
        %v641 = vadd.f32 %v640, 1.1920929e-07
        %v642 = vrsqrt.pop %v641
        %v643 = vmul.f32 %v642, %v641
        %v644 = vmul.f32 %v643, %v642
        %v645 = vmul.f32 0.5, %v644
        %v646 = vsub.f32 1.5, %v645
        %v647 = vmul.f32 %v642, %v646
        %vm648 = vweird.f32 %v641
        %vm649 = vweird.f32 %v642
        %vm650 = vmor %vm648, %vm649
        %v651 = vsel %vm650, %v642, %v647
        %v652 = vmul.f32 %v595, %v651
        %v653 = vmul.f32 %v615, %v615
        %654 = vadd.xlane.f32.xlu0 %v653
        %v655 = vpop.xlane.xlu0 %654
        %v656 = vmul.f32 %v655, %v514
        %v657 = vadd.f32 %v656, 1.1920929e-07
        %v658 = vrsqrt.pop %v657
        %v659 = vmul.f32 %v658, %v657
        %v660 = vmul.f32 %v659, %v658
        %v661 = vmul.f32 0.5, %v660
        %v662 = vsub.f32 1.5, %v661
        %v663 = vmul.f32 %v658, %v662
        %vm664 = vweird.f32 %v657
        %vm665 = vweird.f32 %v658
        %vm666 = vmor %vm664, %vm665
        %v667 = vsel %vm666, %v658, %v663
        %v668 = vmul.f32 %v615, %v667
        %v669 = vstv %s503
        %v670 = vmul.f32 %v635, %v669
        %v671 = vlaneseq
        %v672 = vshrl.u32 %v671, 7
        %v673 = vadd.s32 %v672, 8
        %v674 = vadd.s32 %v672, 16
        %v675 = vadd.s32 %v672, 24
        %v676 = vlaneseq
        %v677 = vand.u32 %v676, 127
        %v678 = vmul.u32 %v677, 4
        %vm679 = vcmp.ge.s32.totalorder %v672, %v678
        %vm680 = vcmp.ge.s32.totalorder %v673, %v678
        %vm681 = vcmp.ge.s32.totalorder %v674, %v678
        %vm682 = vcmp.ge.s32.totalorder %v675, %v678
        %v683 = vadd.s32 %v677, 1
        %v684 = vmul.u32 %v683, 4
        %vm685 = vcmp.lt.s32.totalorder %v672, %v684
        %vm686 = vcmp.lt.s32.totalorder %v673, %v684
        %vm687 = vcmp.lt.s32.totalorder %v674, %v684
        %vm688 = vcmp.lt.s32.totalorder %v675, %v684
        %vm689 = vmand %vm679, %vm685
        %vm690 = vmand %vm680, %vm686
        %vm691 = vmand %vm681, %vm687
        %vm692 = vmand %vm682, %vm688
        %v693 = vsel %vm689, 1, 0
        %v694 = vsel %vm690, 1, 0
        %v695 = vsel %vm691, 1, 0
        %v696 = vsel %vm692, 1, 0
        %v697 = vcvt.s32.f32 %v693
        %v698 = vcvt.s32.f32 %v694
        %v699 = vcvt.s32.f32 %v695
        %v700 = vcvt.s32.f32 %v696
        %vm701 = vcmask 64512
        %v703 = vsel %vm701, %v697, 0
        %v706 = vsel %vm701, %v698, 0
        %v709 = vsel %vm701, %v699, 0
        %v712 = vsel %vm701, %v700, 0
        %714 = vmatpush.msra.mxu0 0.0
        %715 = vmatpush.msra.mxu0 0.0
        %716 = vmatpush.msra.mxu0 0.0
        %717 = vmatpush.msra.mxu0 0.0
        %718 = vmatpush.msra.mxu0 0.0
        %719 = vmatpush.msra.mxu0 0.0
        %720 = vmatpush.msra.mxu0 0.0
        %721 = vmatpush.msra.mxu0 0.0
        %722 = vmatpush.msra.mxu0 0.0
        %723 = vmatpush.msra.mxu0 0.0
        %724 = vmatpush.msra.mxu0 0.0
        %725 = vmatpush.msra.mxu0 0.0
        %726 = vmatpush.msra.mxu0 0.0
        %727 = vmatpush.msra.mxu0 0.0
        %728 = vmatpush.msra.mxu0 0.0
        %729 = vmatpush.msra.mxu0 %v652
        %730 = vmatmul.f32.gmra.mxu0 %v703
        %v731 = vpop.f32.mrf.mxu0
        %v732 = vadd.f32 0.0, %v731
        %733 = vmatmul.f32.gmra.mxu0 %v706
        %v734 = vpop.f32.mrf.mxu0
        %v735 = vadd.f32 0.0, %v734
        %736 = vmatmul.f32.gmra.mxu0 %v709
        %v737 = vpop.f32.mrf.mxu0
        %v738 = vadd.f32 0.0, %v737
        %739 = vmatmul.f32.gmra.mxu0 %v712
        %v740 = vpop.f32.mrf.mxu0
        %v741 = vadd.f32 0.0, %v740
        %742 = vdwg.mxu0
        %743 = vmatpush.msra.mxu0 0.0
        %744 = vmatpush.msra.mxu0 0.0
        %745 = vmatpush.msra.mxu0 0.0
        %746 = vmatpush.msra.mxu0 0.0
        %747 = vmatpush.msra.mxu0 0.0
        %748 = vmatpush.msra.mxu0 0.0
        %749 = vmatpush.msra.mxu0 0.0
        %750 = vmatpush.msra.mxu0 0.0
        %751 = vmatpush.msra.mxu0 0.0
        %752 = vmatpush.msra.mxu0 0.0
        %753 = vmatpush.msra.mxu0 0.0
        %754 = vmatpush.msra.mxu0 0.0
        %755 = vmatpush.msra.mxu0 0.0
        %756 = vmatpush.msra.mxu0 0.0
        %757 = vmatpush.msra.mxu0 0.0
        %758 = vmatpush.msra.mxu0 %v668
        %759 = vmatmul.f32.gmra.mxu0 %v703
        %v760 = vpop.f32.mrf.mxu0
        %v761 = vadd.f32 0.0, %v760
        %762 = vmatmul.f32.gmra.mxu0 %v706
        %v763 = vpop.f32.mrf.mxu0
        %v764 = vadd.f32 0.0, %v763
        %765 = vmatmul.f32.gmra.mxu0 %v709
        %v766 = vpop.f32.mrf.mxu0
        %v767 = vadd.f32 0.0, %v766
        %768 = vmatmul.f32.gmra.mxu0 %v712
        %v769 = vpop.f32.mrf.mxu0
        %v770 = vadd.f32 0.0, %v769
        %771 = vdwg.mxu0
        %772 = vmatpush.msra.mxu0 0.0
        %773 = vmatpush.msra.mxu0 0.0
        %774 = vmatpush.msra.mxu0 0.0
        %775 = vmatpush.msra.mxu0 0.0
        %776 = vmatpush.msra.mxu0 0.0
        %777 = vmatpush.msra.mxu0 0.0
        %778 = vmatpush.msra.mxu0 0.0
        %779 = vmatpush.msra.mxu0 0.0
        %780 = vmatpush.msra.mxu0 0.0
        %781 = vmatpush.msra.mxu0 0.0
        %782 = vmatpush.msra.mxu0 0.0
        %783 = vmatpush.msra.mxu0 0.0
        %784 = vmatpush.msra.mxu0 0.0
        %785 = vmatpush.msra.mxu0 0.0
        %786 = vmatpush.msra.mxu0 0.0
        %787 = vmatpush.msra.mxu0 %v670
        %788 = vmatmul.f32.gmra.mxu0 %v703
        %v789 = vpop.f32.mrf.mxu0
        %v790 = vadd.f32 0.0, %v789
        %791 = vmatmul.f32.gmra.mxu0 %v706
        %v792 = vpop.f32.mrf.mxu0
        %v793 = vadd.f32 0.0, %v792
        %794 = vmatmul.f32.gmra.mxu0 %v709
        %v795 = vpop.f32.mrf.mxu0
        %v796 = vadd.f32 0.0, %v795
        %797 = vmatmul.f32.gmra.mxu0 %v712
        %v798 = vpop.f32.mrf.mxu0
        %v799 = vadd.f32 0.0, %v798
        %800 = vdwg.mxu0
        %801 = vmatpush.msra.mxu0 0.0
        %802 = vmatpush.msra.mxu0 0.0
        %803 = vmatpush.msra.mxu0 0.0
        %804 = vmatpush.msra.mxu0 0.0
        %805 = vmatpush.msra.mxu0 0.0
        %806 = vmatpush.msra.mxu0 0.0
        %807 = vmatpush.msra.mxu0 0.0
        %808 = vmatpush.msra.mxu0 0.0
        %809 = vmatpush.msra.mxu0 0.0
        %810 = vmatpush.msra.mxu0 0.0
        %811 = vmatpush.msra.mxu0 0.0
        %812 = vmatpush.msra.mxu0 0.0
        %813 = vmatpush.msra.mxu0 0.0
        %814 = vmatpush.msra.mxu0 0.0
        %815 = vmatpush.msra.mxu0 0.0
        %816 = vmatpush.msra.mxu0 %v528
        %817 = vmatmul.f32.gmra.mxu0 %v703
        %v818 = vpop.f32.mrf.mxu0
        %v819 = vadd.f32 0.0, %v818
        %820 = vmatmul.f32.gmra.mxu0 %v706
        %v821 = vpop.f32.mrf.mxu0
        %v822 = vadd.f32 0.0, %v821
        %823 = vmatmul.f32.gmra.mxu0 %v709
        %v824 = vpop.f32.mrf.mxu0
        %v825 = vadd.f32 0.0, %v824
        %826 = vmatmul.f32.gmra.mxu0 %v712
        %v827 = vpop.f32.mrf.mxu0
        %v828 = vadd.f32 0.0, %v827
        %829 = vdwg.mxu0
        %830 = vst [vmem:[%s471] sm:$0xff] %v819
        %831 = vst [vmem:[%s471 + $0x8] sm:$0xff] %v822
        %832 = vst [vmem:[%s471 + $0x10] sm:$0xff] %v825
        %833 = vst [vmem:[%s471 + $0x18] sm:$0xff] %v828
        %v834 = vld [vmem:[#allocation8] sm:$0xff]
        %v835 = vld [vmem:[#allocation8 + $0x8] sm:$0xff]
        %v836 = vld [vmem:[#allocation8 + $0x10] sm:$0xff]
        %v837 = vld [vmem:[#allocation8 + $0x18] sm:$0xff]
        %v838 = vld [vmem:[#allocation9] sm:$0xff]
        %v839 = vld [vmem:[#allocation9 + $0x8] sm:$0xff]
        %v840 = vld [vmem:[#allocation9 + $0x10] sm:$0xff]
        %v841 = vld [vmem:[#allocation9 + $0x18] sm:$0xff]
        %v842 = vmul.f32 %v732, %v834
        %v843 = vmul.f32 %v735, %v835
        %v844 = vmul.f32 %v738, %v836
        %v845 = vmul.f32 %v741, %v837
        %846 = vrot.lane.b32.xlu0 %v732, 64
        %v847 = vpop.permute.xlu0 %846
        %848 = vrot.lane.b32.xlu0 %v735, 64
        %v849 = vpop.permute.xlu0 %848
        %850 = vrot.lane.b32.xlu0 %v738, 64
        %v851 = vpop.permute.xlu0 %850
        %852 = vrot.lane.b32.xlu0 %v741, 64
        %v853 = vpop.permute.xlu0 %852
        %v854 = vmul.f32 %v847, %v838
        %v855 = vmul.f32 %v849, %v839
        %v856 = vmul.f32 %v851, %v840
        %v857 = vmul.f32 %v853, %v841
        %v858 = vadd.f32 %v842, %v854
        %v859 = vadd.f32 %v843, %v855
        %v860 = vadd.f32 %v844, %v856
        %v861 = vadd.f32 %v845, %v857
        %v862 = vmul.f32 %v761, %v834
        %v863 = vmul.f32 %v764, %v835
        %v864 = vmul.f32 %v767, %v836
        %v865 = vmul.f32 %v770, %v837
        %866 = vrot.lane.b32.xlu0 %v761, 64
        %v867 = vpop.permute.xlu0 %866
        %868 = vrot.lane.b32.xlu0 %v764, 64
        %v869 = vpop.permute.xlu0 %868
        %870 = vrot.lane.b32.xlu0 %v767, 64
        %v871 = vpop.permute.xlu0 %870
        %872 = vrot.lane.b32.xlu0 %v770, 64
        %v873 = vpop.permute.xlu0 %872
        %v874 = vmul.f32 %v867, %v838
        %v875 = vmul.f32 %v869, %v839
        %v876 = vmul.f32 %v871, %v840
        %v877 = vmul.f32 %v873, %v841
        %v878 = vadd.f32 %v862, %v874
        %v879 = vadd.f32 %v863, %v875
        %v880 = vadd.f32 %v864, %v876
        %v881 = vadd.f32 %v865, %v877
        %882 = vst [vmem:[%s481] sm:$0xff] %v858
        %883 = vst [vmem:[%s481 + $0x8] sm:$0xff] %v859
        %884 = vst [vmem:[%s481 + $0x10] sm:$0xff] %v860
        %885 = vst [vmem:[%s481 + $0x18] sm:$0xff] %v861
        %886 = vst [vmem:[%s491] sm:$0xff] %v878
        %887 = vst [vmem:[%s491 + $0x8] sm:$0xff] %v879
        %888 = vst [vmem:[%s491 + $0x10] sm:$0xff] %v880
        %889 = vst [vmem:[%s491 + $0x18] sm:$0xff] %v881
        %890 = vst [vmem:[%s501] sm:$0xff] %v790
        %891 = vst [vmem:[%s501 + $0x8] sm:$0xff] %v793
        %892 = vst [vmem:[%s501 + $0x10] sm:$0xff] %v796
        %893 = vst [vmem:[%s501 + $0x18] sm:$0xff] %v799
        %s894 = smul.u32 4, %s31
        %p895 = scmp.lt.s32.totalorder %s30, 1
        %s896 = scalar_select %p895, %s30, 1
        %p897 = scmp.lt.s32.totalorder %s894, 3
        %s898 = scalar_select %p897, %s894, 3
        %s899 = smul.addr %s896, 4
        %s900 = sadd.s32 %s898, %s899
        %s901 = smul.addr %s900, 8
        %s902 = scalar_lea.vmem %s5, %s901
        %s903 = smul.u32 4, %s31
        %p904 = scmp.lt.s32.totalorder %s30, 1
        %s905 = scalar_select %p904, %s30, 1
        %p906 = scmp.lt.s32.totalorder %s903, 3
        %s907 = scalar_select %p906, %s903, 3
        %s908 = smul.addr %s905, 4
        %s909 = sadd.s32 %s907, %s908
        %s910 = smul.addr %s909, 8
        %s911 = scalar_lea.vmem %s6, %s910
        %s912 = smul.u32 4, %s31
        %p913 = scmp.lt.s32.totalorder %s30, 1
        %s914 = scalar_select %p913, %s30, 1
        %p915 = scmp.lt.s32.totalorder %s912, 3
        %s916 = scalar_select %p915, %s912, 3
        %s917 = smul.addr %s914, 4
        %s918 = sadd.s32 %s916, %s917
        %s919 = smul.addr %s918, 8
        %s920 = scalar_lea.vmem %s7, %s919
        %s921 = smul.u32 4, %s31
        %p922 = scmp.lt.s32.totalorder %s30, 1
        %s923 = scalar_select %p922, %s30, 1
        %p924 = scmp.lt.s32.totalorder %s921, 3
        %s925 = scalar_select %p924, %s921, 3
        %s926 = smul.addr %s923, 4
        %s927 = sadd.s32 %s925, %s926
        %s928 = smul.addr %s927, 8
        %s929 = scalar_lea.vmem %s8, %s928
        // Predicated region
        $region61: #{byte_mixout_forward.2} parent=39 // pred_check
          %p930 = pneg %p180
        $region62: #{byte_mixout_forward.2} parent=39 // pred_check_branch
          %932 = sbr.rel (%p930) target = $region64
        $region63: #{byte_mixout_forward.2} parent=39 // pred_region
          %s933 = smul.u32 4, %s31
        $region64: #{byte_mixout_forward.2} parent=39 // pred_fallthru
          _
        // Predicated region
        $region65: #{byte_mixout_forward.2} parent=39 // pred_check
          %p934 = pneg %p208
        $region66: #{byte_mixout_forward.2} parent=39 // pred_check_branch
          %936 = sbr.rel (%p934) target = $region68
        $region67: #{byte_mixout_forward.2} parent=39 // pred_region
          %s937 = smul.u32 4, %s31
        $region68: #{byte_mixout_forward.2} parent=39 // pred_fallthru
          _
        // Predicated region
        $region69: #{byte_mixout_forward.2} parent=39 // pred_check
          %p938 = pneg %p236
        $region70: #{byte_mixout_forward.2} parent=39 // pred_check_branch
          %940 = sbr.rel (%p938) target = $region72
        $region71: #{byte_mixout_forward.2} parent=39 // pred_region
          %s941 = smul.u32 4, %s31
        $region72: #{byte_mixout_forward.2} parent=39 // pred_fallthru
          _
        // Predicated region
        $region73: #{byte_mixout_forward.2} parent=39 // pred_check
          %p942 = pneg %p264
        $region74: #{byte_mixout_forward.2} parent=39 // pred_check_branch
          %944 = sbr.rel (%p942) target = $region76
        $region75: #{byte_mixout_forward.2} parent=39 // pred_region
          %s945 = smul.u32 4, %s31
        $region76: #{byte_mixout_forward.2} parent=39 // pred_fallthru
          _
      $region40: #{byte_mixout_forward.2} parent=5 // pred_fallthru
        _
      %p946 = scmp.le.s32.totalorder 2, %s21
      // Predicated region
      $region77: #{byte_mixout_forward.2} parent=5 // pred_check
        %p947 = pneg %p946
      $region78: #{byte_mixout_forward.2} parent=5 // pred_check_branch
        %949 = sbr.rel (%p947) target = $region80
      $region79: #{byte_mixout_forward.2} parent=5 // pred_region
        %s950 = ssub.s32 %s21, 2
        // Predicated region
        $region81: #{byte_mixout_forward.2} parent=79 // pred_check
          %p951 = pneg %p186
        $region82: #{byte_mixout_forward.2} parent=79 // pred_check_branch
          %953 = sbr.rel (%p951) target = $region84
        $region83: #{byte_mixout_forward.2} parent=79 // pred_region
          %s954 = smul.u32 4, %s33
          %p955 = scmp.lt.s32.totalorder %s32, 1
          %s956 = scalar_select %p955, %s32, 1
          %p957 = scmp.lt.s32.totalorder %s954, 3
          %s958 = scalar_select %p957, %s954, 3
          %s959 = smul.addr %s956, 4
          %s960 = sadd.s32 %s958, %s959
          %s961 = smul.addr %s960, 8
          %s962 = scalar_lea.vmem %s5, %s961
        $region84: #{byte_mixout_forward.2} parent=79 // pred_fallthru
          _
        // Predicated region
        $region85: #{byte_mixout_forward.2} parent=79 // pred_check
          %p963 = pneg %p214
        $region86: #{byte_mixout_forward.2} parent=79 // pred_check_branch
          %965 = sbr.rel (%p963) target = $region88
        $region87: #{byte_mixout_forward.2} parent=79 // pred_region
          %s966 = smul.u32 4, %s33
          %p967 = scmp.lt.s32.totalorder %s32, 1
          %s968 = scalar_select %p967, %s32, 1
          %p969 = scmp.lt.s32.totalorder %s966, 3
          %s970 = scalar_select %p969, %s966, 3
          %s971 = smul.addr %s968, 4
          %s972 = sadd.s32 %s970, %s971
          %s973 = smul.addr %s972, 8
          %s974 = scalar_lea.vmem %s6, %s973
        $region88: #{byte_mixout_forward.2} parent=79 // pred_fallthru
          _
        // Predicated region
        $region89: #{byte_mixout_forward.2} parent=79 // pred_check
          %p975 = pneg %p242
        $region90: #{byte_mixout_forward.2} parent=79 // pred_check_branch
          %977 = sbr.rel (%p975) target = $region92
        $region91: #{byte_mixout_forward.2} parent=79 // pred_region
          %s978 = smul.u32 4, %s33
          %p979 = scmp.lt.s32.totalorder %s32, 1
          %s980 = scalar_select %p979, %s32, 1
          %p981 = scmp.lt.s32.totalorder %s978, 3
          %s982 = scalar_select %p981, %s978, 3
          %s983 = smul.addr %s980, 4
          %s984 = sadd.s32 %s982, %s983
          %s985 = smul.addr %s984, 8
          %s986 = scalar_lea.vmem %s7, %s985
        $region92: #{byte_mixout_forward.2} parent=79 // pred_fallthru
          _
        // Predicated region
        $region93: #{byte_mixout_forward.2} parent=79 // pred_check
          %p987 = pneg %p270
        $region94: #{byte_mixout_forward.2} parent=79 // pred_check_branch
          %989 = sbr.rel (%p987) target = $region96
        $region95: #{byte_mixout_forward.2} parent=79 // pred_region
          %s990 = smul.u32 4, %s33
          %p991 = scmp.lt.s32.totalorder %s32, 1
          %s992 = scalar_select %p991, %s32, 1
          %p993 = scmp.lt.s32.totalorder %s990, 3
          %s994 = scalar_select %p993, %s990, 3
          %s995 = smul.addr %s992, 4
          %s996 = sadd.s32 %s994, %s995
          %s997 = smul.addr %s996, 8
          %s998 = scalar_lea.vmem %s8, %s997
        $region96: #{byte_mixout_forward.2} parent=79 // pred_fallthru
          _
      $region80: #{byte_mixout_forward.2} parent=5 // pred_fallthru
        _
    $region6: #{byte_mixout_forward.2} parent=1 // loop_footer
      %s25 = sadd.s32 1, %s21
    $region7: #{byte_mixout_forward.2} parent=1 // loop_footer_branch
      %20 = sbr.rel target = $region3
    $region8: #{byte_mixout_forward.2} parent=1 // loop_exit
      _
    %999 = vsyncpa [#allocation3], 1
    %s1000 = scalar_lea.sflag [#allocation3], 1
    %1001 = vsyncpa %s1000, 1
    %1002 = vsyncpa [#allocation7], 1
    %1003 = vsyncpa [#allocation10], 1
    %1004 = vsyncpa [#allocation4], 1
    %s1005 = scalar_lea.sflag [#allocation4], 1
    %1006 = vsyncpa %s1005, 1

// kernel: byte_mixout_forward.3
$region0: #{byte_mixout_forward.3}
  #allocation0 [shape = 'u32[]', space=smem, size = 0x4, offset = 0x4, fixed_abs, tag = 'smem constant byte address 0x4 - core index']
  #allocation1 [shape = 'u32[72,128]{1,0:T(1,128)}', space=vmem, size = 0x9000, scoped, tag = 'internal scratch']
  #allocation2 [shape = 'f32[1,16,1]{2,1,0:T(8,128)}', space=vmem, size = 0x2000, scoped, tag = 'scratch operand']
  #allocation3 [shape = 'f32[1,16,1]{2,1,0:T(8,128)}', space=vmem, size = 0x2000, scoped, tag = 'scratch operand']
  #allocation4 [shape = 'f32[1,16,128]{2,1,0:T(8,128)}', space=vmem, size = 0x2000, scoped, tag = 'scratch operand']
  %s0 = inlined_call_operand.vmem [shape: f32[2,1,32,128], index: 0, kind: input, shape index: {}]
  %s1 = inlined_call_operand.vmem [shape: f32[2,1,32,128], index: 1, kind: input, shape index: {}]
  %s2 = inlined_call_operand.vmem [shape: f32[2,1,32,128], index: 2, kind: input, shape index: {}]
  %s3 = inlined_call_operand.vmem [shape: f32[2,32,128], index: 3, kind: input, shape index: {}]
  %s4 = inlined_call_operand.hbm [shape: f32[128,128], index: 4, kind: input, shape index: {}]
  %s5 = inlined_call_operand.hbm [shape: f32[2,32,128], index: 5, kind: output, shape index: {}]
  %s6 = sld [smem:[#allocation0]]
  $region69: #{byte_mixout_forward.3} parent=0
    _
  %s8 = ssub.s32 1, %s6
  %s9 = scalar_select 0, %s8, %s6
  $region1: #{byte_mixout_forward.3} parent=0
    #allocation5 [shape = 'u8[65536]{0}', space=vmem, size = 0x10000, scoped, tag = 'input window, operand 4, single buffered']
    #allocation6 [shape = 's32[2]{0}', space=sflag, size = 0x8, scoped, tag = 'scoped memory for byte_mixout_forward.3']
    #allocation7 [shape = 's32[2]{0}', space=sflag, size = 0x8, scoped, tag = 'scoped memory for byte_mixout_forward.3']
    #allocation8 [shape = 'u8[16384]{0}', space=vmem, size = 0x4000, scoped, tag = 'output window, operand 0']
    %10 = vsyncpa [#allocation6], 0
    %11 = vsyncpa [#allocation7], 0
    %s12 = scalar_lea.sflag [#allocation7], 1
    %13 = vsyncpa %s12, 0
    loop: start=0, step=1, limit=10
    $region2: #{byte_mixout_forward.3} parent=1 // loop_pre_header
      _
    $region3: #{byte_mixout_forward.3} parent=1 // loop_header
      %s15 = sphi 0, %s19
      %p16 = scmp.ge.s32.totalorder %s15, 10
      %s22 = sphi 0, %s41
      %s23 = sphi 0, %s37
      %s24 = sphi 0, %s33
      %s25 = sphi 0, %s22
      %s26 = sphi 0, %s23
      %s27 = sphi 0, %s24
      %s28 = sphi 0, %s25
      %s29 = sphi 0, %s26
      %s30 = sphi 0, %s27
      %s46 = sphi 0, %s48
      %s49 = sphi 0, %s46
      %s50 = sphi 0, %s49
      %s66 = sphi 0, %s50
      %s82 = sphi 0, %s84
      %s85 = sphi 0, %s82
      %s86 = sphi 0, %s85
      %s102 = sphi 0, %s86
      %s118 = sphi 0, %s120
      %s121 = sphi 0, %s118
      %s122 = sphi 0, %s121
      %s138 = sphi 0, %s122
      %s146 = sphi 0, %s148
      %s149 = sphi 0, %s146
      %s150 = sphi 0, %s149
      %s166 = sphi 0, %s150
      %s170 = sphi 0, %s170
      %s172 = sphi 0, %s170
      %s173 = sphi 0, %s172
      %s187 = sphi 0, %s173
      %s195 = sphi 0, %s197
      %s198 = sphi 0, %s195
      %s199 = sphi 0, %s198
      %s215 = sphi 0, %s199
    $region4: #{byte_mixout_forward.3} parent=1 // loop_header_branch
      %18 = sbr.rel (%p16) target = $region8
    $region5: #{byte_mixout_forward.3} parent=1 // loop_body
      %s20 = ssub.s32 %s15, 1
      %s21 = ssub.s32 %s15, 2
      %s31 = sadd.s32 1, %s24
      %p32 = scmp.ge.s32.totalorder %s31, 2
      %s33 = scalar_select %p32, 0, %s31
      %s34 = sadd.s32 1, %s23
      %s35 = scalar_select %p32, %s34, %s23
      %p36 = scmp.ge.s32.totalorder %s35, 2
      %s37 = scalar_select %p36, 0, %s35
      %s38 = sadd.s32 1, %s22
      %s39 = scalar_select %p36, %s38, %s22
      %p40 = scmp.ge.s32.totalorder %s39, 2
      %s41 = scalar_select %p40, 0, %s39
      %s42 = ssub.s32 %s22, %s41
      %s43 = ssub.s32 %s23, %s37
      %s44 = sor.u32 %s42, %s43
      %p45 = scmp.eq.s32.totalorder %s44, 0
      %s47 = sadd.s32 %s46, 1
      %s48 = scalar_select %p45, %s46, %s47
      %p51 = pneg %p45
      %p52 = scmp.eq.s32.totalorder %s15, 7
      %p53 = por %p51, %p52
      %p54 = scmp.ne.s32.totalorder %s46, %s49
      %p55 = scmp.eq.s32.totalorder %s15, 0
      %p56 = por %p54, %p55
      %p57 = scmp.ne.s32.totalorder %s46, %s49
      %p58 = scmp.eq.s32.totalorder %s20, 7
      %p59 = por %p57, %p58
      %p60 = scmp.ne.s32.totalorder %s49, %s50
      %p61 = scmp.eq.s32.totalorder %s20, 0
      %p62 = por %p60, %p61
      %p63 = scmp.ne.s32.totalorder %s49, %s50
      %p64 = scmp.eq.s32.totalorder %s21, 7
      %p65 = por %p63, %p64
      %p67 = scmp.ne.s32.totalorder %s50, %s66
      %p68 = scmp.eq.s32.totalorder %s21, 0
      %p69 = por %p67, %p68
      %s70 = ssub.s32 %s23, 1
      %s71 = sadd.s32 %s70, %s24
      %p72 = scmp.gt.s32.totalorder %s71, 0
      %s73 = scalar_select %p72, %s71, 0
      %s74 = ssub.s32 %s37, 1
      %s75 = sadd.s32 %s74, %s33
      %p76 = scmp.gt.s32.totalorder %s75, 0
      %s77 = scalar_select %p76, %s75, 0
      %s78 = ssub.s32 %s22, %s41
      %s79 = ssub.s32 %s73, %s77
      %s80 = sor.u32 %s78, %s79
      %p81 = scmp.eq.s32.totalorder %s80, 0
      %s83 = sadd.s32 %s82, 1
      %s84 = scalar_select %p81, %s82, %s83
      %p87 = pneg %p81
      %p88 = scmp.eq.s32.totalorder %s15, 7
      %p89 = por %p87, %p88
      %p90 = scmp.ne.s32.totalorder %s82, %s85
      %p91 = scmp.eq.s32.totalorder %s15, 0
      %p92 = por %p90, %p91
      %p93 = scmp.ne.s32.totalorder %s82, %s85
      %p94 = scmp.eq.s32.totalorder %s20, 7
      %p95 = por %p93, %p94
      %p96 = scmp.ne.s32.totalorder %s85, %s86
      %p97 = scmp.eq.s32.totalorder %s20, 0
      %p98 = por %p96, %p97
      %p99 = scmp.ne.s32.totalorder %s85, %s86
      %p100 = scmp.eq.s32.totalorder %s21, 7
      %p101 = por %p99, %p100
      %p103 = scmp.ne.s32.totalorder %s86, %s102
      %p104 = scmp.eq.s32.totalorder %s21, 0
      %p105 = por %p103, %p104
      %s106 = ssub.s32 %s23, 1
      %s107 = sadd.s32 %s106, %s24
      %p108 = scmp.gt.s32.totalorder %s107, 0
      %s109 = scalar_select %p108, %s107, 0
      %s110 = ssub.s32 %s37, 1
      %s111 = sadd.s32 %s110, %s33
      %p112 = scmp.gt.s32.totalorder %s111, 0
      %s113 = scalar_select %p112, %s111, 0
      %s114 = ssub.s32 %s22, %s41
      %s115 = ssub.s32 %s109, %s113
      %s116 = sor.u32 %s114, %s115
      %p117 = scmp.eq.s32.totalorder %s116, 0
      %s119 = sadd.s32 %s118, 1
      %s120 = scalar_select %p117, %s118, %s119
      %p123 = pneg %p117
      %p124 = scmp.eq.s32.totalorder %s15, 7
      %p125 = por %p123, %p124
      %p126 = scmp.ne.s32.totalorder %s118, %s121
      %p127 = scmp.eq.s32.totalorder %s15, 0
      %p128 = por %p126, %p127
      %p129 = scmp.ne.s32.totalorder %s118, %s121
      %p130 = scmp.eq.s32.totalorder %s20, 7
      %p131 = por %p129, %p130
      %p132 = scmp.ne.s32.totalorder %s121, %s122
      %p133 = scmp.eq.s32.totalorder %s20, 0
      %p134 = por %p132, %p133
      %p135 = scmp.ne.s32.totalorder %s121, %s122
      %p136 = scmp.eq.s32.totalorder %s21, 7
      %p137 = por %p135, %p136
      %p139 = scmp.ne.s32.totalorder %s122, %s138
      %p140 = scmp.eq.s32.totalorder %s21, 0
      %p141 = por %p139, %p140
      %s142 = ssub.s32 %s22, %s41
      %s143 = ssub.s32 %s23, %s37
      %s144 = sor.u32 %s142, %s143
      %p145 = scmp.eq.s32.totalorder %s144, 0
      %s147 = sadd.s32 %s146, 1
      %s148 = scalar_select %p145, %s146, %s147
      %p151 = pneg %p145
      %p152 = scmp.eq.s32.totalorder %s15, 7
      %p153 = por %p151, %p152
      %p154 = scmp.ne.s32.totalorder %s146, %s149
      %p155 = scmp.eq.s32.totalorder %s15, 0
      %p156 = por %p154, %p155
      %p157 = scmp.ne.s32.totalorder %s146, %s149
      %p158 = scmp.eq.s32.totalorder %s20, 7
      %p159 = por %p157, %p158
      %p160 = scmp.ne.s32.totalorder %s149, %s150
      %p161 = scmp.eq.s32.totalorder %s20, 0
      %p162 = por %p160, %p161
      %p163 = scmp.ne.s32.totalorder %s149, %s150
      %p164 = scmp.eq.s32.totalorder %s21, 7
      %p165 = por %p163, %p164
      %p167 = scmp.ne.s32.totalorder %s150, %s166
      %p168 = scmp.eq.s32.totalorder %s21, 0
      %p169 = por %p167, %p168
      %s171 = sadd.s32 %s170, 1
      %p174 = scmp.eq.s32.totalorder %s15, 7
      %p175 = scmp.ne.s32.totalorder %s170, %s172
      %p176 = scmp.eq.s32.totalorder %s15, 0
      %p177 = por %p175, %p176
      %p178 = scmp.ne.s32.totalorder %s170, %s172
      %p179 = scmp.eq.s32.totalorder %s20, 7
      %p180 = por %p178, %p179
      %p181 = scmp.ne.s32.totalorder %s172, %s173
      %p182 = scmp.eq.s32.totalorder %s20, 0
      %p183 = por %p181, %p182
      %p184 = scmp.ne.s32.totalorder %s172, %s173
      %p185 = scmp.eq.s32.totalorder %s21, 7
      %p186 = por %p184, %p185
      %p188 = scmp.ne.s32.totalorder %s173, %s187
      %p189 = scmp.eq.s32.totalorder %s21, 0
      %p190 = por %p188, %p189
      %s191 = ssub.s32 %s22, %s41
      %s192 = ssub.s32 %s23, %s37
      %s193 = sor.u32 %s191, %s192
      %p194 = scmp.eq.s32.totalorder %s193, 0
      %s196 = sadd.s32 %s195, 1
      %s197 = scalar_select %p194, %s195, %s196
      %p200 = pneg %p194
      %p201 = scmp.eq.s32.totalorder %s15, 7
      %p202 = por %p200, %p201
      %p203 = scmp.ne.s32.totalorder %s195, %s198
      %p204 = scmp.eq.s32.totalorder %s15, 0
      %p205 = por %p203, %p204
      %p206 = scmp.ne.s32.totalorder %s195, %s198
      %p207 = scmp.eq.s32.totalorder %s20, 7
      %p208 = por %p206, %p207
      %p209 = scmp.ne.s32.totalorder %s198, %s199
      %p210 = scmp.eq.s32.totalorder %s20, 0
      %p211 = por %p209, %p210
      %p212 = scmp.ne.s32.totalorder %s198, %s199
      %p213 = scmp.eq.s32.totalorder %s21, 7
      %p214 = por %p212, %p213
      %p216 = scmp.ne.s32.totalorder %s199, %s215
      %p217 = scmp.eq.s32.totalorder %s21, 0
      %p218 = por %p216, %p217
      %p219 = scmp.le.s32.totalorder 1, %s15
      %p220 = scmp.lt.s32.totalorder %s15, 9
      %p221 = pnand %p219, %p220
      %p222 = pneg %p221
      // Predicated region
      $region9: #{byte_mixout_forward.3} parent=5 // pred_check
        _
      $region10: #{byte_mixout_forward.3} parent=5 // pred_check_branch
        %224 = sbr.rel (%p221) target = $region12
      $region11: #{byte_mixout_forward.3} parent=5 // pred_region
        %s225 = ssub.s32 %s15, 1
        // Predicated region
        $region13: #{byte_mixout_forward.3} parent=11 // pred_check
          %p226 = pneg %p183
        $region14: #{byte_mixout_forward.3} parent=11 // pred_check_branch
          %228 = sbr.rel (%p226) target = $region16
        $region15: #{byte_mixout_forward.3} parent=11 // pred_region
          %230 = vsyncadd [#allocation6], 0
          %s231 = sshll.u32 %s4, 4
          %s232 = int_to_ptr.hbm [resolvable:$true] %s231
          %s233 = sshll.u32 [#allocation5], 4
          %s234 = int_to_ptr.vmem [resolvable:$true] %s233
          %239 = dma.hbm_to_vmem [thread:$0]  %s232, 2048, %s234, [#allocation6], 128, 128, 8
        $region16: #{byte_mixout_forward.3} parent=11 // pred_fallthru
          _
      $region12: #{byte_mixout_forward.3} parent=5 // pred_fallthru
        _
      %p240 = scmp.lt.s32.totalorder %s15, 8
      // Predicated region
      $region17: #{byte_mixout_forward.3} parent=5 // pred_check
        %p241 = pneg %p240
      $region18: #{byte_mixout_forward.3} parent=5 // pred_check_branch
        %243 = sbr.rel (%p241) target = $region20
      $region19: #{byte_mixout_forward.3} parent=5 // pred_region
        // Predicated region
        $region21: #{byte_mixout_forward.3} parent=19 // pred_check
          %p244 = pneg %p56
        $region22: #{byte_mixout_forward.3} parent=19 // pred_check_branch
          %246 = sbr.rel (%p244) target = $region24
        $region23: #{byte_mixout_forward.3} parent=19 // pred_region
          %s247 = smul.u32 2, %s23
          %p248 = scmp.lt.s32.totalorder %s22, 1
          %s249 = scalar_select %p248, %s22, 1
          %p250 = scmp.lt.s32.totalorder %s247, 3
          %s251 = scalar_select %p250, %s247, 3
          %s252 = smul.addr %s249, 4
          %s253 = sadd.s32 %s251, %s252
          %s254 = smul.addr %s253, 8
          %s255 = scalar_lea.vmem %s0, %s254
          %s256 = smul.u32 2, %s23
        $region24: #{byte_mixout_forward.3} parent=19 // pred_fallthru
          _
        // Predicated region
        $region25: #{byte_mixout_forward.3} parent=19 // pred_check
          %p257 = pneg %p92
        $region26: #{byte_mixout_forward.3} parent=19 // pred_check_branch
          %259 = sbr.rel (%p257) target = $region28
        $region27: #{byte_mixout_forward.3} parent=19 // pred_region
          %s260 = ssub.s32 %s23, 1
          %s261 = sadd.s32 %s260, %s24
          %p262 = scmp.gt.s32.totalorder %s261, 0
          %s263 = scalar_select %p262, %s261, 0
          %s264 = smul.u32 2, %s263
          %p265 = scmp.lt.s32.totalorder %s22, 1
          %s266 = scalar_select %p265, %s22, 1
          %p267 = scmp.lt.s32.totalorder %s264, 3
          %s268 = scalar_select %p267, %s264, 3
          %s269 = smul.addr %s266, 4
          %s270 = sadd.s32 %s268, %s269
          %s271 = smul.addr %s270, 8
          %s272 = scalar_lea.vmem %s1, %s271
          %s273 = ssub.s32 %s23, 1
          %s274 = sadd.s32 %s273, %s24
          %p275 = scmp.gt.s32.totalorder %s274, 0
          %s276 = scalar_select %p275, %s274, 0
          %s277 = smul.u32 2, %s276
        $region28: #{byte_mixout_forward.3} parent=19 // pred_fallthru
          _
        // Predicated region
        $region29: #{byte_mixout_forward.3} parent=19 // pred_check
          %p278 = pneg %p128
        $region30: #{byte_mixout_forward.3} parent=19 // pred_check_branch
          %280 = sbr.rel (%p278) target = $region32
        $region31: #{byte_mixout_forward.3} parent=19 // pred_region
          %s281 = ssub.s32 %s23, 1
          %s282 = sadd.s32 %s281, %s24
          %p283 = scmp.gt.s32.totalorder %s282, 0
          %s284 = scalar_select %p283, %s282, 0
          %s285 = smul.u32 2, %s284
          %p286 = scmp.lt.s32.totalorder %s22, 1
          %s287 = scalar_select %p286, %s22, 1
          %p288 = scmp.lt.s32.totalorder %s285, 3
          %s289 = scalar_select %p288, %s285, 3
          %s290 = smul.addr %s287, 4
          %s291 = sadd.s32 %s289, %s290
          %s292 = smul.addr %s291, 8
          %s293 = scalar_lea.vmem %s2, %s292
          %s294 = ssub.s32 %s23, 1
          %s295 = sadd.s32 %s294, %s24
          %p296 = scmp.gt.s32.totalorder %s295, 0
          %s297 = scalar_select %p296, %s295, 0
          %s298 = smul.u32 2, %s297
        $region32: #{byte_mixout_forward.3} parent=19 // pred_fallthru
          _
        // Predicated region
        $region33: #{byte_mixout_forward.3} parent=19 // pred_check
          %p299 = pneg %p156
        $region34: #{byte_mixout_forward.3} parent=19 // pred_check_branch
          %301 = sbr.rel (%p299) target = $region36
        $region35: #{byte_mixout_forward.3} parent=19 // pred_region
          %s302 = smul.u32 2, %s23
          %p303 = scmp.lt.s32.totalorder %s22, 1
          %s304 = scalar_select %p303, %s22, 1
          %p305 = scmp.lt.s32.totalorder %s302, 3
          %s306 = scalar_select %p305, %s302, 3
          %s307 = smul.addr %s304, 4
          %s308 = sadd.s32 %s306, %s307
          %s309 = smul.addr %s308, 8
          %s310 = scalar_lea.vmem %s3, %s309
          %s311 = smul.u32 2, %s23
        $region36: #{byte_mixout_forward.3} parent=19 // pred_fallthru
          _
      $region20: #{byte_mixout_forward.3} parent=5 // pred_fallthru
        _
      %p312 = scmp.le.s32.totalorder 1, %s15
      %p313 = scmp.lt.s32.totalorder %s15, 9
      %p314 = pnand %p312, %p313
      %p315 = pneg %p314
      // Predicated region
      $region37: #{byte_mixout_forward.3} parent=5 // pred_check
        _
      $region38: #{byte_mixout_forward.3} parent=5 // pred_check_branch
        %317 = sbr.rel (%p314) target = $region40
      $region39: #{byte_mixout_forward.3} parent=5 // pred_region
        %s318 = ssub.s32 %s15, 1
        // Predicated region
        $region41: #{byte_mixout_forward.3} parent=39 // pred_check
          %p319 = pneg %p183
        $region42: #{byte_mixout_forward.3} parent=39 // pred_check_branch
          %321 = sbr.rel (%p319) target = $region44
        $region43: #{byte_mixout_forward.3} parent=39 // pred_region
          %323 = dma.done [#allocation6], 2048
        $region44: #{byte_mixout_forward.3} parent=39 // pred_fallthru
          _
        %s324 = smul.u32 2, %s26
        %p325 = scmp.lt.s32.totalorder %s25, 1
        %s326 = scalar_select %p325, %s25, 1
        %p327 = scmp.lt.s32.totalorder %s324, 3
        %s328 = scalar_select %p327, %s324, 3
        %s329 = smul.addr %s326, 4
        %s330 = sadd.s32 %s328, %s329
        %s331 = smul.addr %s330, 8
        %s332 = scalar_lea.vmem %s0, %s331
        %p333 = pneg %p62
        %p334 = pneg %p59
        %s335 = ssub.s32 %s26, 1
        %s336 = sadd.s32 %s335, %s27
        %p337 = scmp.gt.s32.totalorder %s336, 0
        %s338 = scalar_select %p337, %s336, 0
        %s339 = smul.u32 2, %s338
        %p340 = scmp.lt.s32.totalorder %s25, 1
        %s341 = scalar_select %p340, %s25, 1
        %p342 = scmp.lt.s32.totalorder %s339, 3
        %s343 = scalar_select %p342, %s339, 3
        %s344 = smul.addr %s341, 4
        %s345 = sadd.s32 %s343, %s344
        %s346 = smul.addr %s345, 8
        %s347 = scalar_lea.vmem %s1, %s346
        %p348 = pneg %p98
        %p349 = pneg %p95
        %s350 = ssub.s32 %s26, 1
        %s351 = sadd.s32 %s350, %s27
        %p352 = scmp.gt.s32.totalorder %s351, 0
        %s353 = scalar_select %p352, %s351, 0
        %s354 = smul.u32 2, %s353
        %p355 = scmp.lt.s32.totalorder %s25, 1
        %s356 = scalar_select %p355, %s25, 1
        %p357 = scmp.lt.s32.totalorder %s354, 3
        %s358 = scalar_select %p357, %s354, 3
        %s359 = smul.addr %s356, 4
        %s360 = sadd.s32 %s358, %s359
        %s361 = smul.addr %s360, 8
        %s362 = scalar_lea.vmem %s2, %s361
        %p363 = pneg %p134
        %p364 = pneg %p131
        %s365 = smul.u32 2, %s26
        %p366 = scmp.lt.s32.totalorder %s25, 1
        %s367 = scalar_select %p366, %s25, 1
        %p368 = scmp.lt.s32.totalorder %s365, 3
        %s369 = scalar_select %p368, %s365, 3
        %s370 = smul.addr %s367, 4
        %s371 = sadd.s32 %s369, %s370
        %s372 = smul.addr %s371, 8
        %s373 = scalar_lea.vmem %s3, %s372
        %p374 = pneg %p162
        %p375 = pneg %p159
        %p376 = pneg %p183
        %p377 = pneg %p180
        %p378 = pneg %p211
        %p379 = pneg %p208
        %s380 = sand.u32 %s198, 1
        %s381 = scalar_lea.sflag [#allocation7], %s380
        %s382 = sand.u32 %s198, 1
        %s383 = smul.addr %s382, 16
        %s384 = scalar_lea.vmem [#allocation8], %s383
        %s385 = smul.u32 2, %s26
        %p386 = scmp.lt.s32.totalorder %s25, 1
        %s387 = scalar_select %p386, %s25, 1
        %p388 = scmp.lt.s32.totalorder %s385, 3
        %s389 = scalar_select %p388, %s385, 3
        %s390 = smul.addr %s387, 4
        %s391 = sadd.s32 %s389, %s390
        %s392 = smul.addr %s391, 8
        %s393 = scalar_lea.vmem %s0, %s392
        %s394 = smul.u32 2, %s26
        %s395 = ssub.s32 %s26, 1
        %s396 = sadd.s32 %s395, %s27
        %p397 = scmp.gt.s32.totalorder %s396, 0
        %s398 = scalar_select %p397, %s396, 0
        %s399 = smul.u32 2, %s398
        %p400 = scmp.lt.s32.totalorder %s25, 1
        %s401 = scalar_select %p400, %s25, 1
        %p402 = scmp.lt.s32.totalorder %s399, 3
        %s403 = scalar_select %p402, %s399, 3
        %s404 = smul.addr %s401, 4
        %s405 = sadd.s32 %s403, %s404
        %s406 = smul.addr %s405, 8
        %s407 = scalar_lea.vmem %s1, %s406
        %s408 = ssub.s32 %s26, 1
        %s409 = sadd.s32 %s408, %s27
        %p410 = scmp.gt.s32.totalorder %s409, 0
        %s411 = scalar_select %p410, %s409, 0
        %s412 = smul.u32 2, %s411
        %s413 = ssub.s32 %s26, 1
        %s414 = sadd.s32 %s413, %s27
        %p415 = scmp.gt.s32.totalorder %s414, 0
        %s416 = scalar_select %p415, %s414, 0
        %s417 = smul.u32 2, %s416
        %p418 = scmp.lt.s32.totalorder %s25, 1
        %s419 = scalar_select %p418, %s25, 1
        %p420 = scmp.lt.s32.totalorder %s417, 3
        %s421 = scalar_select %p420, %s417, 3
        %s422 = smul.addr %s419, 4
        %s423 = sadd.s32 %s421, %s422
        %s424 = smul.addr %s423, 8
        %s425 = scalar_lea.vmem %s2, %s424
        %s426 = ssub.s32 %s26, 1
        %s427 = sadd.s32 %s426, %s27
        %p428 = scmp.gt.s32.totalorder %s427, 0
        %s429 = scalar_select %p428, %s427, 0
        %s430 = smul.u32 2, %s429
        %s431 = smul.u32 2, %s26
        %p432 = scmp.lt.s32.totalorder %s25, 1
        %s433 = scalar_select %p432, %s25, 1
        %p434 = scmp.lt.s32.totalorder %s431, 3
        %s435 = scalar_select %p434, %s431, 3
        %s436 = smul.addr %s433, 4
        %s437 = sadd.s32 %s435, %s436
        %s438 = smul.addr %s437, 8
        %s439 = scalar_lea.vmem %s3, %s438
        %s440 = smul.u32 2, %s26
        %s441 = smul.u32 2, %s26
        %s442 = ssub.s32 %s26, 1
        %s443 = sadd.s32 %s442, %s27
        %p444 = scmp.eq.s32.totalorder %s27, 0
        // Predicated region
        $region45: #{byte_mixout_forward.3} parent=39 // pred_check
          %p445 = pneg %p444
        $region46: #{byte_mixout_forward.3} parent=39 // pred_check_branch
          %447 = sbr.rel (%p445) target = $region48
        $region47: #{byte_mixout_forward.3} parent=39 // pred_region
          %vm448 = vcmask 7168
          %449 = vst.msk [vmem:[#allocation2] sm:$0xff] %vm448, -inf
          %450 = vst.msk [vmem:[#allocation2 + $0x8] sm:$0xff] %vm448, -inf
          %451 = vst.msk [vmem:[#allocation3] sm:$0xff] %vm448, 0.0
          %452 = vst.msk [vmem:[#allocation3 + $0x8] sm:$0xff] %vm448, 0.0
          %453 = vst [vmem:[#allocation4] sm:$0xff] 0.0
          %454 = vst [vmem:[#allocation4 + $0x8] sm:$0xff] 0.0
        $region48: #{byte_mixout_forward.3} parent=39 // pred_fallthru
          _
        %p455 = scmp.ge.s32.totalorder %s443, 0
        // Predicated region
        $region49: #{byte_mixout_forward.3} parent=39 // pred_check
          %p456 = pneg %p455
        $region50: #{byte_mixout_forward.3} parent=39 // pred_check_branch
          %458 = sbr.rel (%p456) target = $region52
        $region51: #{byte_mixout_forward.3} parent=39 // pred_region
          %s459 = smul.u32 %s26, 16
          %v460 = vlaneseq
          %v461 = vshrl.u32 %v460, 7
          %v462 = vadd.s32 %v461, 8
          %v463 = vstv %s459
          %v464 = vadd.s32 %v463, %v461
          %v465 = vadd.s32 %v463, %v462
          %s466 = smul.u32 %s443, 16
          %v467 = vlaneseq
          %v468 = vand.u32 %v467, 127
          %v469 = vstv %s466
          %v470 = vadd.s32 %v469, %v468
          %vm471 = vcmp.ge.s32.totalorder %v464, %v470
          %vm472 = vcmp.ge.s32.totalorder %v465, %v470
          %v473 = vsub.s32 %v464, %v470
          %v474 = vsub.s32 %v465, %v470
          %vm475 = vcmp.lt.s32.totalorder %v473, 8
          %vm476 = vcmp.lt.s32.totalorder %v474, 8
          %vm477 = vmand %vm471, %vm475
          %vm478 = vmand %vm472, %vm476
          %v479 = vld [vmem:[%s393] sm:$0xff]
          %v480 = vld [vmem:[%s393 + $0x8] sm:$0xff]
          %v481 = vld [vmem:[%s407] sm:$0xff]
          %v482 = vld [vmem:[%s407 + $0x8] sm:$0xff]
          %v483 = vld [vmem:[%s425] sm:$0xff]
          %v484 = vld [vmem:[%s425 + $0x8] sm:$0xff]
          %485 = vmatpush.xpose.msra.mxu0 0.0
          %486 = vmatpush.xpose.msra.mxu0 0.0
          %487 = vmatpush.xpose.msra.mxu0 0.0
          %488 = vmatpush.xpose.msra.mxu0 0.0
          %489 = vmatpush.xpose.msra.mxu0 0.0
          %490 = vmatpush.xpose.msra.mxu0 0.0
          %491 = vmatpush.xpose.msra.mxu0 0.0
          %492 = vmatpush.xpose.msra.mxu0 0.0
          %493 = vmatpush.xpose.msra.mxu0 0.0
          %494 = vmatpush.xpose.msra.mxu0 0.0
          %495 = vmatpush.xpose.msra.mxu0 0.0
          %496 = vmatpush.xpose.msra.mxu0 0.0
          %497 = vmatpush.xpose.msra.mxu0 0.0
          %498 = vmatpush.xpose.msra.mxu0 0.0
          %499 = vmatpush.xpose.msra.mxu0 %v482
          %500 = vmatpush.xpose.msra.mxu0 %v481
          %501 = vmatmul.f32.gmra.mxu0 %v479
          %v502 = vpop.f32.mrf.mxu0
          %v503 = vadd.f32 0.0, %v502
          %504 = vmatmul.f32.gmra.mxu0 %v480
          %v505 = vpop.f32.mrf.mxu0
          %v506 = vadd.f32 0.0, %v505
          %507 = vdwg.mxu0
          %v508 = vmul.f32 %v503, 0.12
          %v509 = vmul.f32 %v506, 0.12
          %v510 = vsel %vm477, %v508, -1e+30
          %v511 = vsel %vm478, %v509, -1e+30
          %v512 = vld [vmem:[#allocation2] sm:$0xff]
          %v513 = vld [vmem:[#allocation2 + $0x8] sm:$0xff]
          %vm514 = vcmask 130048
          %v515 = vsel %vm514, %v510, -inf
          %516 = vmax.xlane.f32.xlu0 %v515
          %v517 = vpop.xlane.xlu0 %516
          %v518 = vsel %vm514, %v511, -inf
          %519 = vmax.xlane.f32.xlu0 %v518
          %v520 = vpop.xlane.xlu0 %519
          %v521 = vmax.f32 %v512, %v517
          %v522 = vmax.f32 %v513, %v520
          %v523 = vsub.f32 %v512, %v521
          %v524 = vsub.f32 %v513, %v522
          %v525 = vmul.f32 %v523, 1.442695
          %v526 = vpow.pop %v525
          %v527 = vmul.f32 %v524, 1.442695
          %v528 = vpow.pop %v527
          %530 = vset.pattern.permute.xlu0 0
          %531 = vperm.xlu0 %530, %v521
          %v532 = vpop.permute.xlu0 %531
          %535 = vset.pattern.permute.xlu0 0
          %536 = vperm.xlu0 %535, %v522
          %v537 = vpop.permute.xlu0 %536
          %v539 = vsub.f32 %v510, %v532
          %v540 = vsub.f32 %v511, %v537
          %v541 = vmul.f32 %v539, 1.442695
          %v542 = vpow.pop %v541
          %v543 = vmul.f32 %v540, 1.442695
          %v544 = vpow.pop %v543
          %v545 = vld [vmem:[#allocation3] sm:$0xff]
          %v546 = vld [vmem:[#allocation3 + $0x8] sm:$0xff]
          %v547 = vmul.f32 %v526, %v545
          %v548 = vmul.f32 %v528, %v546
          %v549 = vsel %vm514, %v542, 0.0
          %550 = vadd.xlane.f32.xlu0 %v549
          %v551 = vpop.xlane.xlu0 %550
          %v552 = vsel %vm514, %v544, 0.0
          %553 = vadd.xlane.f32.xlu0 %v552
          %v554 = vpop.xlane.xlu0 %553
          %v555 = vadd.f32 %v547, %v551
          %v556 = vadd.f32 %v548, %v554
          %vm557 = vcmask 7168
          %558 = vst.msk [vmem:[#allocation3] sm:$0xff] %vm557, %v555
          %559 = vst.msk [vmem:[#allocation3 + $0x8] sm:$0xff] %vm557, %v556
          %v560 = vld [vmem:[#allocation4] sm:$0xff]
          %v561 = vld [vmem:[#allocation4 + $0x8] sm:$0xff]
          %563 = vset.pattern.permute.xlu0 0
          %564 = vperm.xlu0 %563, %v526
          %v565 = vpop.permute.xlu0 %564
          %568 = vset.pattern.permute.xlu0 0
          %569 = vperm.xlu0 %568, %v528
          %v570 = vpop.permute.xlu0 %569
          %v572 = vmul.f32 %v565, %v560
          %v573 = vmul.f32 %v570, %v561
          %v575 = vsel %vm514, %v542, 0
          %v578 = vsel %vm514, %v544, 0
          %580 = vmatpush.msra.mxu0 0.0
          %581 = vmatpush.msra.mxu0 0.0
          %582 = vmatpush.msra.mxu0 0.0
          %583 = vmatpush.msra.mxu0 0.0
          %584 = vmatpush.msra.mxu0 0.0
          %585 = vmatpush.msra.mxu0 0.0
          %586 = vmatpush.msra.mxu0 0.0
          %587 = vmatpush.msra.mxu0 0.0
          %588 = vmatpush.msra.mxu0 0.0
          %589 = vmatpush.msra.mxu0 0.0
          %590 = vmatpush.msra.mxu0 0.0
          %591 = vmatpush.msra.mxu0 0.0
          %592 = vmatpush.msra.mxu0 0.0
          %593 = vmatpush.msra.mxu0 0.0
          %594 = vmatpush.msra.mxu0 %v484
          %595 = vmatpush.msra.mxu0 %v483
          %596 = vmatmul.f32.gmra.mxu0 %v575
          %v597 = vpop.f32.mrf.mxu0
          %v598 = vadd.f32 0.0, %v597
          %599 = vmatmul.f32.gmra.mxu0 %v578
          %v600 = vpop.f32.mrf.mxu0
          %v601 = vadd.f32 0.0, %v600
          %602 = vdwg.mxu0
          %v603 = vadd.f32 %v572, %v598
          %v604 = vadd.f32 %v573, %v601
          %605 = vst [vmem:[#allocation4] sm:$0xff] %v603
          %606 = vst [vmem:[#allocation4 + $0x8] sm:$0xff] %v604
          %607 = vst.msk [vmem:[#allocation2] sm:$0xff] %vm557, %v521
          %608 = vst.msk [vmem:[#allocation2 + $0x8] sm:$0xff] %vm557, %v522
        $region52: #{byte_mixout_forward.3} parent=39 // pred_fallthru
          _
        %p609 = scmp.eq.s32.totalorder %s27, 1
        // Predicated region
        $region53: #{byte_mixout_forward.3} parent=39 // pred_check
          %p610 = pneg %p609
        $region54: #{byte_mixout_forward.3} parent=39 // pred_check_branch
          %612 = sbr.rel (%p610) target = $region56
        $region55: #{byte_mixout_forward.3} parent=39 // pred_region
          %v613 = vld [vmem:[#allocation3] sm:$0xff]
          %v614 = vld [vmem:[#allocation3 + $0x8] sm:$0xff]
          %v615 = vrcp.pop %v613
          %v616 = vrcp.pop %v614
          %v617 = vmul.f32 %v613, %v615
          %v618 = vmul.f32 %v614, %v616
          %v619 = vsub.f32 2.0, %v617
          %v620 = vsub.f32 2.0, %v618
          %v621 = vmul.f32 %v615, %v619
          %v622 = vmul.f32 %v616, %v620
          %v623 = vld [vmem:[#allocation4] sm:$0xff]
          %v624 = vld [vmem:[#allocation4 + $0x8] sm:$0xff]
          %626 = vset.pattern.permute.xlu0 0
          %627 = vperm.xlu0 %626, %v621
          %v628 = vpop.permute.xlu0 %627
          %631 = vset.pattern.permute.xlu0 0
          %632 = vperm.xlu0 %631, %v622
          %v633 = vpop.permute.xlu0 %632
          %v635 = vmul.f32 %v623, %v628
          %v636 = vmul.f32 %v624, %v633
          %v637 = vld [vmem:[#allocation5] sm:$0xff]
          %v638 = vld [vmem:[#allocation5 + $0x8] sm:$0xff]
          %v639 = vld [vmem:[#allocation5 + $0x10] sm:$0xff]
          %v640 = vld [vmem:[#allocation5 + $0x18] sm:$0xff]
          %v641 = vld [vmem:[#allocation5 + $0x20] sm:$0xff]
          %v642 = vld [vmem:[#allocation5 + $0x28] sm:$0xff]
          %v643 = vld [vmem:[#allocation5 + $0x30] sm:$0xff]
          %v644 = vld [vmem:[#allocation5 + $0x38] sm:$0xff]
          %v645 = vld [vmem:[#allocation5 + $0x40] sm:$0xff]
          %v646 = vld [vmem:[#allocation5 + $0x48] sm:$0xff]
          %v647 = vld [vmem:[#allocation5 + $0x50] sm:$0xff]
          %v648 = vld [vmem:[#allocation5 + $0x58] sm:$0xff]
          %v649 = vld [vmem:[#allocation5 + $0x60] sm:$0xff]
          %v650 = vld [vmem:[#allocation5 + $0x68] sm:$0xff]
          %v651 = vld [vmem:[#allocation5 + $0x70] sm:$0xff]
          %v652 = vld [vmem:[#allocation5 + $0x78] sm:$0xff]
          %653 = vmatpush.msra.mxu0 %v652
          %654 = vmatpush.msra.mxu0 %v651
          %655 = vmatpush.msra.mxu0 %v650
          %656 = vmatpush.msra.mxu0 %v649
          %657 = vmatpush.msra.mxu0 %v648
          %658 = vmatpush.msra.mxu0 %v647
          %659 = vmatpush.msra.mxu0 %v646
          %660 = vmatpush.msra.mxu0 %v645
          %661 = vmatpush.msra.mxu0 %v644
          %662 = vmatpush.msra.mxu0 %v643
          %663 = vmatpush.msra.mxu0 %v642
          %664 = vmatpush.msra.mxu0 %v641
          %665 = vmatpush.msra.mxu0 %v640
          %666 = vmatpush.msra.mxu0 %v639
          %667 = vmatpush.msra.mxu0 %v638
          %668 = vmatpush.msra.mxu0 %v637
          %669 = vmatmul.f32.gmra.mxu0 %v635
          %v670 = vpop.f32.mrf.mxu0
          %v671 = vadd.f32 0.0, %v670
          %672 = vmatmul.f32.gmra.mxu0 %v636
          %v673 = vpop.f32.mrf.mxu0
          %v674 = vadd.f32 0.0, %v673
          %675 = vdwg.mxu0
          %v676 = vld [vmem:[%s439] sm:$0xff]
          %v677 = vld [vmem:[%s439 + $0x8] sm:$0xff]
          %v678 = vadd.f32 %v676, %v671
          %v679 = vadd.f32 %v677, %v674
          %680 = vst [vmem:[%s384] sm:$0xff] %v678
          %681 = vst [vmem:[%s384 + $0x8] sm:$0xff] %v679
        $region56: #{byte_mixout_forward.3} parent=39 // pred_fallthru
          _
        %s682 = sand.u32 %s198, 1
        %s683 = scalar_lea.sflag [#allocation7], %s682
        %s684 = sand.u32 %s198, 1
        %s685 = smul.addr %s684, 16
        %s686 = scalar_lea.vmem [#allocation8], %s685
        // Predicated region
        $region57: #{byte_mixout_forward.3} parent=39 // pred_check
          %p687 = pneg %p208
        $region58: #{byte_mixout_forward.3} parent=39 // pred_check_branch
          %689 = sbr.rel (%p687) target = $region60
        $region59: #{byte_mixout_forward.3} parent=39 // pred_region
          %s690 = smul.u32 2, %s26
          %692 = vsyncadd %s683, 0
          %s693 = smul.addr %s25, 4
          %s694 = sadd.s32 %s690, %s693
          %s695 = smul.addr %s694, 8
          %s696 = scalar_lea.hbm %s5, %s695
          %s697 = sshll.u32 %s686, 4
          %s698 = int_to_ptr.vmem [resolvable:$true] %s697
          %s699 = sshll.u32 %s696, 4
          %s700 = int_to_ptr.hbm [resolvable:$true] %s699
          %705 = dma.vmem_to_hbm [thread:$0]  %s698, 256, %s700, %s683, 128, 128, 8
        $region60: #{byte_mixout_forward.3} parent=39 // pred_fallthru
          _
      $region40: #{byte_mixout_forward.3} parent=5 // pred_fallthru
        _
      %p706 = scmp.le.s32.totalorder 2, %s15
      // Predicated region
      $region61: #{byte_mixout_forward.3} parent=5 // pred_check
        %p707 = pneg %p706
      $region62: #{byte_mixout_forward.3} parent=5 // pred_check_branch
        %709 = sbr.rel (%p707) target = $region64
      $region63: #{byte_mixout_forward.3} parent=5 // pred_region
        %s710 = ssub.s32 %s15, 2
        // Predicated region
        $region65: #{byte_mixout_forward.3} parent=63 // pred_check
          %p711 = pneg %p214
        $region66: #{byte_mixout_forward.3} parent=63 // pred_check_branch
          %713 = sbr.rel (%p711) target = $region68
        $region67: #{byte_mixout_forward.3} parent=63 // pred_region
          %s714 = sand.u32 %s199, 1
          %s715 = scalar_lea.sflag [#allocation7], %s714
          %s716 = sand.u32 %s199, 1
          %s717 = smul.addr %s716, 16
          %s718 = scalar_lea.vmem [#allocation8], %s717
          %720 = dma.done %s715, 256
        $region68: #{byte_mixout_forward.3} parent=63 // pred_fallthru
          _
      $region64: #{byte_mixout_forward.3} parent=5 // pred_fallthru
        _
    $region6: #{byte_mixout_forward.3} parent=1 // loop_footer
      %s19 = sadd.s32 1, %s15
    $region7: #{byte_mixout_forward.3} parent=1 // loop_footer_branch
      %14 = sbr.rel target = $region3
    $region8: #{byte_mixout_forward.3} parent=1 // loop_exit
      _
    %721 = vsyncpa [#allocation6], 1
    %s722 = scalar_lea.sflag [#allocation6], 1
    %723 = vsyncpa %s722, 1
    %724 = vsyncpa [#allocation7], 1
    %s725 = scalar_lea.sflag [#allocation7], 1
    %726 = vsyncpa %s725, 1

</llo_original>
